<compile_context>
chip_gen: v6e
topology: v6e:2x2x1
jax: 0.10.0
libtpu: 0.0.40
codegen_flags: <defaults>
</compile_context>

<pallas_src>
import jax
import jax.numpy as jnp
import numpy as np
from jax.experimental import pallas as pl
from jax.experimental.pallas import tpu as pltpu

# ---- model hyper-parameters (mirror SpatialRegressionTCNv0.__init__) ----
FEATURE_DIM = 4      # feature_dim
SPATIAL_DIM = 8      # spatial_dim
TIME_DIM = 16        # time_dim (sequence length L)
OUTPUT_DIM = 3       # output_dim
HIDDEN = 32          # hidden_channels
DEPTH = 2            # network_depth
KSIZE = 3            # filter_width
NEG_SLOPE = 0.01     # nn.LeakyReLU default slope
BATCH = 2

DILATIONS = [2 ** i for i in range(DEPTH)]

# ---- packed-parameter slab layout (bf16, HIDDEN lanes wide) ----
ROW_ALIGN = 16       # bf16 packs 2 rows/sublane word -> 16-row aligned sections


def _build_layout():
    slots = []
    for i in range(DEPTH):
        cin = FEATURE_DIM if i == 0 else HIDDEN
        for k in range(KSIZE):
            slots.append((f"w1_{i}_{k}", cin))
        for k in range(KSIZE):
            slots.append((f"w2_{i}_{k}", HIDDEN))
    slots += [("wd", FEATURE_DIM), ("wfc1h", HIDDEN),
              ("wfc1s", SPATIAL_DIM), ("wfc2", HIDDEN)]
    for i in range(DEPTH):
        slots += [(f"b1_{i}", 1), (f"b2_{i}", 1)]
    slots += [("bd", 1), ("bfc1", 1), ("bfc2", 1)]
    offs, row = {}, 0
    for name, nrows in slots:
        offs[name] = row
        row += -(-nrows // ROW_ALIGN) * ROW_ALIGN
    return offs, row


OFFS, P_ROWS = _build_layout()      # P_ROWS == 544


def _relu(x):
    return jnp.maximum(x, 0.0)


# ------------------------------ kernel ------------------------------
def tcn_forward_kernel(x_ref, p_ref, out_ref):
    """One grid step == one batch tile of TB elements.

    x_ref   : (TB, L, FEATURE_DIM + SPATIAL_DIM)  raw model input (f32)
    p_ref   : (P_ROWS, HIDDEN)                    packed bf16 parameter slab
    out_ref : (TB, HIDDEN)                        lane-dense output (cols 0..2 valid)
    """
    tb = x_ref.shape[0]
    rows = tb * TIME_DIM

    x = x_ref[...]                                        # (tb, L, F+S) f32
    sp = x[:, 0, FEATURE_DIM:]                            # (tb, S)
    h = x[:, :, :FEATURE_DIM].reshape(rows, FEATURE_DIM)  # (tb*L, F) f32

    def wslice(name, nrows):                              # bf16 weight tile
        return p_ref[pl.ds(OFFS[name], nrows), :]

    def bias(name):                                       # (1, H) f32
        return p_ref[pl.ds(OFFS[name], 1), :].astype(jnp.float32)

    def mxu(a, w):
        # bf16 operands, f32 accumulation -> single MXU pass.
        return jnp.dot(a.astype(jnp.bfloat16), w,
                       preferred_element_type=jnp.float32)

    # time index within each batch element (for causal masking of rolled taps)
    t_idx = jax.lax.broadcasted_iota(jnp.int32, (rows, 1), 0) % TIME_DIM

    # fc1 spatial contribution -- independent of the conv chain; issue early so
    # it is hidden off the serial critical path.
    sp_pre = mxu(sp, wslice("wfc1s", SPATIAL_DIM)) + bias("bfc1")   # (tb, H)

    def causal_conv(inp, wprefix, bname, dilation, cin):
        # y[t] = bias + sum_k inp[t - (K-1-k)*d] @ W_k   (zero where t-shift < 0)
        out = None
        for k in range(KSIZE):
            shift = (KSIZE - 1 - k) * dilation
            w = p_ref[pl.ds(OFFS[f"{wprefix}_{k}"], cin), :]        # (cin, H) bf16
            if shift == 0:
                tap = inp
            else:
                rolled = pltpu.roll(inp, shift, axis=0)             # XLU sublane roll
                tap = jnp.where(t_idx >= shift, rolled, 0.0)        # causal mask
            part = mxu(tap, w)                                      # (rows, H) f32
            out = part if out is None else out + part
        return out + bias(bname)

    for i in range(DEPTH):
        d = DILATIONS[i]
        cin = FEATURE_DIM if i == 0 else HIDDEN
        res_in = h
        # conv1 -> relu (dropout == identity at inference)
        y = _relu(causal_conv(h, f"w1_{i}", f"b1_{i}", d, cin))
        # conv2 -> relu
        oc = _relu(causal_conv(y, f"w2_{i}", f"b2_{i}", d, HIDDEN))
        # residual path (1x1 conv only when channel counts differ, i.e. block 0)
        if i == 0:
            res = mxu(res_in, wslice("wd", FEATURE_DIM)) + bias("bd")
        else:
            res = res_in
        h = _relu(oc + res)                                         # block output

    # AdaptiveAvgPool1d(1) over time (after NLC->NCL transpose in torch).
    pooled = jnp.mean(h.reshape(tb, TIME_DIM, HIDDEN), axis=1)      # (tb, H)

    z = mxu(pooled, wslice("wfc1h", HIDDEN)) + sp_pre               # fc1
    z = jnp.where(z >= 0.0, z, NEG_SLOPE * z)                       # LeakyReLU
    o = mxu(z, wslice("wfc2", HIDDEN)) + bias("bfc2")               # fc2 (cols 3..31 = 0)
    out_ref[...] = o.astype(out_ref.dtype)                          # lane-dense store


# ------------------------------ wrapper ------------------------------
def pack_params(params):
    """One-time host-side packing of all weights/biases into a bf16 slab."""
    p = {k: np.asarray(v, np.float32) for k, v in params.items()}
    slab = np.zeros((P_ROWS, HIDDEN), np.float32)
    for i in range(DEPTH):
        cin = FEATURE_DIM if i == 0 else HIDDEN
        for k in range(KSIZE):
            o1 = OFFS[f"w1_{i}_{k}"]
            o2 = OFFS[f"w2_{i}_{k}"]
            slab[o1:o1 + cin] = p[f"w1_{i}"][k]
            slab[o2:o2 + HIDDEN] = p[f"w2_{i}"][k]
        slab[OFFS[f"b1_{i}"]] = p[f"b1_{i}"]
        slab[OFFS[f"b2_{i}"]] = p[f"b2_{i}"]
    slab[OFFS["wd"]:OFFS["wd"] + FEATURE_DIM] = p["wd"]
    slab[OFFS["bd"]] = p["bd"]
    slab[OFFS["wfc1h"]:OFFS["wfc1h"] + HIDDEN] = p["wfc1"][:HIDDEN]
    slab[OFFS["wfc1s"]:OFFS["wfc1s"] + SPATIAL_DIM] = p["wfc1"][HIDDEN:]
    slab[OFFS["bfc1"]] = p["bfc1"]
    slab[OFFS["wfc2"]:OFFS["wfc2"] + HIDDEN, :OUTPUT_DIM] = p["wfc2"]
    slab[OFFS["bfc2"], :OUTPUT_DIM] = p["bfc2"]
    return jnp.asarray(slab, dtype=jnp.bfloat16)


def _pick_tb(batch, seq_len):
    """Batch-tile size: ~1024 matmul rows per grid step; must divide batch and
    keep the (tb, HIDDEN) output block sublane-aligned (tb == batch or tb % 8 == 0)."""
    target = max(1, 1024 // seq_len)
    if batch <= target:
        return batch
    for tb in range(target, 0, -1):
        if batch % tb == 0 and (tb % 8 == 0 or tb == batch):
            return tb
    return batch


def spatial_regression_tcn_forward(x, slab):
    """x: (B, L, FEATURE_DIM + SPATIAL_DIM), slab: packed bf16 params -> (B, OUTPUT_DIM)."""
    B, L, C = x.shape
    assert L == TIME_DIM and C == FEATURE_DIM + SPATIAL_DIM
    tb = _pick_tb(B, L)
    nb = B // tb

    out32 = pl.pallas_call(
        tcn_forward_kernel,
        out_shape=jax.ShapeDtypeStruct((B, HIDDEN), jnp.float32),
        grid_spec=pltpu.PrefetchScalarGridSpec(
            num_scalar_prefetch=0,
            grid=(nb,),
            in_specs=[
                pl.BlockSpec((tb, TIME_DIM, C), lambda i: (i, 0, 0)),
                pl.BlockSpec((P_ROWS, HIDDEN), lambda i: (0, 0)),
            ],
            out_specs=pl.BlockSpec((tb, HIDDEN), lambda i: (i, 0)),
        ),
        # Independent batch tiles -> v7x's two TensorCores may split the grid;
        # harmless on v5e/v6e.
        compiler_params=pltpu.CompilerParams(
            dimension_semantics=("parallel",)),
    )(x, slab)
    return out32[:, :OUTPUT_DIM]


# ---------------- deterministic parameter construction ----------------
def _xavier_uniform(key, shape, fan_in, fan_out):
    limit = float(np.sqrt(6.0 / (fan_in + fan_out)))
    return jax.random.uniform(key, shape, jnp.float32, -limit, limit)


def init_params(key):
    keys = iter(jax.random.split(key, DEPTH * 4 + 7))
    params = {}
    for i in range(DEPTH):
        cin = FEATURE_DIM if i == 0 else HIDDEN
        params[f"w1_{i}"] = _xavier_uniform(next(keys), (KSIZE, cin, HIDDEN),
                                            cin * KSIZE, HIDDEN * KSIZE)
        params[f"b1_{i}"] = jax.random.uniform(next(keys), (HIDDEN,), jnp.float32, -0.1, 0.1)
        params[f"w2_{i}"] = _xavier_uniform(next(keys), (KSIZE, HIDDEN, HIDDEN),
                                            HIDDEN * KSIZE, HIDDEN * KSIZE)
        params[f"b2_{i}"] = jax.random.uniform(next(keys), (HIDDEN,), jnp.float32, -0.1, 0.1)
    params["wd"] = _xavier_uniform(next(keys), (FEATURE_DIM, HIDDEN), FEATURE_DIM, HIDDEN)
    params["bd"] = jax.random.uniform(next(keys), (HIDDEN,), jnp.float32, -0.1, 0.1)
    params["wfc1"] = _xavier_uniform(next(keys), (HIDDEN + SPATIAL_DIM, HIDDEN),
                                     HIDDEN + SPATIAL_DIM, HIDDEN)
    params["bfc1"] = jax.random.uniform(next(keys), (HIDDEN,), jnp.float32, -0.1, 0.1)
    params["wfc2"] = _xavier_uniform(next(keys), (HIDDEN, OUTPUT_DIM), HIDDEN, OUTPUT_DIM)
    params["bfc2"] = jax.random.uniform(next(keys), (OUTPUT_DIM,), jnp.float32, -0.1, 0.1)
    return params


# ------------- pure-JAX reference (same math, for verification) -------------
def reference_forward(x, params, *, bf16=False):
    """bf16=False: exact f32 math of the PyTorch module.
    bf16=True : mirrors the kernel (bf16 weights/biases, bf16 MXU operands,
    f32 accumulation, f32 elementwise)."""
    f32 = jnp.float32

    def mm(a, w):
        if bf16:
            a = a.astype(jnp.bfloat16)
            w = w.astype(jnp.bfloat16)
        return jnp.einsum("...c,cd->...d", a, w,
                          preferred_element_type=f32,
                          precision=jax.lax.Precision.HIGHEST)

    def qb(b):
        return b.astype(jnp.bfloat16).astype(f32) if bf16 else b.astype(f32)

    x = x.astype(f32)
    spatial = x[:, 0, FEATURE_DIM:]
    h = x[:, :, :FEATURE_DIM]

    def causal_conv(inp, w, b, d):
        pad = (KSIZE - 1) * d
        xp = jnp.pad(inp, ((0, 0), (pad, 0), (0, 0)))
        acc = jnp.zeros(inp.shape[:2] + (HIDDEN,), f32) + qb(b)[None, None, :]
        for k in range(KSIZE):
            acc = acc + mm(xp[:, k * d:k * d + TIME_DIM, :], w[k])
        return acc

    for i in range(DEPTH):
        d = DILATIONS[i]
        res_in = h
        y = jax.nn.relu(causal_conv(h, params[f"w1_{i}"], params[f"b1_{i}"], d))
        oc = jax.nn.relu(causal_conv(y, params[f"w2_{i}"], params[f"b2_{i}"], d))
        if i == 0:
            res = mm(res_in, params["wd"]) + qb(params["bd"])[None, None, :]
        else:
            res = res_in
        h = jax.nn.relu(oc + res)

    pooled = jnp.mean(h, axis=1)                                    # (B, H)
    cat = jnp.concatenate([pooled, spatial], axis=1)
    z = mm(cat, params["wfc1"]) + qb(params["bfc1"])
    z = jnp.where(z >= 0.0, z, NEG_SLOPE * z)
    return mm(z, params["wfc2"]) + qb(params["bfc2"])


if __name__ == "__main__":
    key = jax.random.PRNGKey(0)
    pkey, xkey = jax.random.split(key)
    params = init_params(pkey)
    slab = pack_params(params)        # one-time packing, hoisted out of the forward path
    x = jax.random.normal(xkey, (BATCH, TIME_DIM, FEATURE_DIM + SPATIAL_DIM),
                          jnp.float32)

    fwd = jax.jit(spatial_regression_tcn_forward)
    out = jax.block_until_ready(fwd(x, slab))
    assert out.shape == (BATCH, OUTPUT_DIM)

    # Tight check against a reference that mirrors the kernel's bf16 weights /
    # MXU operands (same math, different code path).
    ref_bf16 = reference_forward(x, params, bf16=True)
    np.testing.assert_allclose(np.asarray(out), np.asarray(ref_bf16),
                               rtol=1e-2, atol=1e-2)

    # Looser check against the exact-f32 math of the PyTorch module.
    ref_exact = reference_forward(x, params, bf16=False)
    np.testing.assert_allclose(np.asarray(out), np.asarray(ref_exact),
                               rtol=5e-2, atol=5e-2)

    print("KERNEL_OK")
</pallas_src>

<mosaic_0001>
module attributes {stable_mosaic.version = 11 : i64} {
  func.func @tcn_forward_kernel(%arg0: i32, %arg1: memref<2x16x12xf32, #tpu.memory_space<vmem>>, %arg2: memref<544x32xbf16, #tpu.memory_space<vmem>>, %arg3: memref<2x32xf32, #tpu.memory_space<vmem>>) attributes {dimension_semantics = [#tpu.dimension_semantics<parallel>], iteration_bounds = array<i64: 1>, scalar_prefetch = 0 : i64, scratch_operands = 0 : i64, tpu.core_type = #tpu.core_type<tc>, window_params = [{transform_indices = @transform_0, window_bounds = array<i64: 2, 16, 12>}, {pipeline_mode = #tpu.pipeline_mode<synchronous>, transform_indices = @transform_1, window_bounds = array<i64: 544, 32>}, {transform_indices = @transform_2, window_bounds = array<i64: 2, 32>}]} {
    %c0 = arith.constant 0 : index
    %c0_0 = arith.constant 0 : index
    %c0_1 = arith.constant 0 : index
    %0 = vector.load %arg1[%c0, %c0_0, %c0_1] : memref<2x16x12xf32, #tpu.memory_space<vmem>>, vector<2x16x12xf32>
    %1 = vector.extract_strided_slice %0 {offsets = [0, 0, 4], sizes = [2, 1, 8], strides = [1, 1, 1]} : vector<2x16x12xf32> to vector<2x1x8xf32>
    %2 = vector.shape_cast %1 : vector<2x1x8xf32> to vector<2x8xf32>
    %3 = vector.extract_strided_slice %0 {offsets = [0, 0, 0], sizes = [2, 16, 4], strides = [1, 1, 1]} : vector<2x16x12xf32> to vector<2x16x4xf32>
    %4 = vector.shape_cast %3 : vector<2x16x4xf32> to vector<32x4xf32>
    %5 = tpu.iota {dimensions = array<i32: 0>} : vector<32x1xi32>
    %c16_i32 = arith.constant 16 : i32
    %c0_i32 = arith.constant 0 : i32
    %6 = arith.cmpi eq, %c16_i32, %c0_i32 : i32
    %c1_i32 = arith.constant 1 : i32
    %7 = arith.select %6, %c1_i32, %c16_i32 : i32
    %8 = vector.broadcast %7 : i32 to vector<32x1xi32>
    %9 = arith.remsi %5, %8 : vector<32x1xi32>
    %c0_i32_2 = arith.constant 0 : i32
    %10 = vector.broadcast %c0_i32_2 : i32 to vector<32x1xi32>
    %11 = arith.cmpi ne, %9, %10 : vector<32x1xi32>
    %c0_i32_3 = arith.constant 0 : i32
    %12 = vector.broadcast %c0_i32_3 : i32 to vector<32x1xi32>
    %13 = arith.cmpi slt, %9, %12 : vector<32x1xi32>
    %c0_i32_4 = arith.constant 0 : i32
    %14 = arith.cmpi slt, %7, %c0_i32_4 : i32
    %15 = vector.broadcast %14 : i1 to vector<32x1xi1>
    %16 = vector.broadcast %15 : vector<32x1xi1> to vector<32x1xi1>
    %17 = arith.xori %13, %16 : vector<32x1xi1>
    %18 = arith.andi %17, %11 : vector<32x1xi1>
    %19 = vector.broadcast %7 : i32 to vector<32x1xi32>
    %20 = arith.addi %9, %19 : vector<32x1xi32>
    %21 = arith.select %18, %20, %9 : vector<32x1xi1>, vector<32x1xi32>
    %c384 = arith.constant 384 : index
    %c0_5 = arith.constant 0 : index
    %22 = vector.load %arg2[%c384, %c0_5] : memref<544x32xbf16, #tpu.memory_space<vmem>>, vector<8x32xbf16>
    %23 = arith.truncf %2 : vector<2x8xf32> to vector<2x8xbf16>
    %cst = arith.constant dense<0.000000e+00> : vector<2x32xf32>
    %24 = tpu.matmul %23, %22, %cst {dimension_numbers = #tpu.dot_dimension_numbers<[1], [0], [0], [1], [0, 0, 1, 1], [], []>} : vector<2x8xbf16>, vector<8x32xbf16>, vector<2x32xf32> -> vector<2x32xf32>
    %c512 = arith.constant 512 : index
    %c0_6 = arith.constant 0 : index
    %25 = vector.load %arg2[%c512, %c0_6] : memref<544x32xbf16, #tpu.memory_space<vmem>>, vector<1x32xbf16>
    %26 = arith.extf %25 : vector<1x32xbf16> to vector<1x32xf32>
    %27 = vector.broadcast %26 : vector<1x32xf32> to vector<2x32xf32>
    %28 = arith.addf %24, %27 : vector<2x32xf32>
    %c0_7 = arith.constant 0 : index
    %c0_8 = arith.constant 0 : index
    %29 = vector.load %arg2[%c0_7, %c0_8] : memref<544x32xbf16, #tpu.memory_space<vmem>>, vector<4x32xbf16>
    %c2_i32 = arith.constant 2 : i32
    %30 = tpu.dynamic_rotate %4 by %c2_i32 dim 0 : vector<32x4xf32>, i32 -> vector<32x4xf32>
    %c2_i32_9 = arith.constant 2 : i32
    %31 = vector.broadcast %c2_i32_9 : i32 to vector<32x1xi32>
    %32 = arith.cmpi sge, %21, %31 : vector<32x1xi32>
    %cst_10 = arith.constant 0.000000e+00 : f32
    %33 = vector.shape_cast %32 : vector<32x1xi1> to vector<32x1xi1>
    %34 = vector.broadcast %33 : vector<32x1xi1> to vector<32x4xi1>
    %35 = vector.broadcast %cst_10 : f32 to vector<32x4xf32>
    %36 = arith.select %34, %30, %35 : vector<32x4xi1>, vector<32x4xf32>
    %37 = arith.truncf %36 : vector<32x4xf32> to vector<32x4xbf16>
    %cst_11 = arith.constant dense<0.000000e+00> : vector<32x32xf32>
    %38 = tpu.matmul %37, %29, %cst_11 {dimension_numbers = #tpu.dot_dimension_numbers<[1], [0], [0], [1], [0, 0, 1, 1], [], []>} : vector<32x4xbf16>, vector<4x32xbf16>, vector<32x32xf32> -> vector<32x32xf32>
    %c16 = arith.constant 16 : index
    %c0_12 = arith.constant 0 : index
    %39 = vector.load %arg2[%c16, %c0_12] : memref<544x32xbf16, #tpu.memory_space<vmem>>, vector<4x32xbf16>
    %c1_i32_13 = arith.constant 1 : i32
    %40 = tpu.dynamic_rotate %4 by %c1_i32_13 dim 0 : vector<32x4xf32>, i32 -> vector<32x4xf32>
    %c1_i32_14 = arith.constant 1 : i32
    %41 = vector.broadcast %c1_i32_14 : i32 to vector<32x1xi32>
    %42 = arith.cmpi sge, %21, %41 : vector<32x1xi32>
    %cst_15 = arith.constant 0.000000e+00 : f32
    %43 = vector.shape_cast %42 : vector<32x1xi1> to vector<32x1xi1>
    %44 = vector.broadcast %43 : vector<32x1xi1> to vector<32x4xi1>
    %45 = vector.broadcast %cst_15 : f32 to vector<32x4xf32>
    %46 = arith.select %44, %40, %45 : vector<32x4xi1>, vector<32x4xf32>
    %47 = arith.truncf %46 : vector<32x4xf32> to vector<32x4xbf16>
    %cst_16 = arith.constant dense<0.000000e+00> : vector<32x32xf32>
    %48 = tpu.matmul %47, %39, %cst_16 {dimension_numbers = #tpu.dot_dimension_numbers<[1], [0], [0], [1], [0, 0, 1, 1], [], []>} : vector<32x4xbf16>, vector<4x32xbf16>, vector<32x32xf32> -> vector<32x32xf32>
    %49 = arith.addf %38, %48 : vector<32x32xf32>
    %c32 = arith.constant 32 : index
    %c0_17 = arith.constant 0 : index
    %50 = vector.load %arg2[%c32, %c0_17] : memref<544x32xbf16, #tpu.memory_space<vmem>>, vector<4x32xbf16>
    %51 = arith.truncf %4 : vector<32x4xf32> to vector<32x4xbf16>
    %cst_18 = arith.constant dense<0.000000e+00> : vector<32x32xf32>
    %52 = tpu.matmul %51, %50, %cst_18 {dimension_numbers = #tpu.dot_dimension_numbers<[1], [0], [0], [1], [0, 0, 1, 1], [], []>} : vector<32x4xbf16>, vector<4x32xbf16>, vector<32x32xf32> -> vector<32x32xf32>
    %53 = arith.addf %49, %52 : vector<32x32xf32>
    %c432 = arith.constant 432 : index
    %c0_19 = arith.constant 0 : index
    %54 = vector.load %arg2[%c432, %c0_19] : memref<544x32xbf16, #tpu.memory_space<vmem>>, vector<1x32xbf16>
    %55 = arith.extf %54 : vector<1x32xbf16> to vector<1x32xf32>
    %56 = vector.broadcast %55 : vector<1x32xf32> to vector<32x32xf32>
    %57 = arith.addf %53, %56 : vector<32x32xf32>
    %cst_20 = arith.constant 0.000000e+00 : f32
    %58 = vector.broadcast %cst_20 : f32 to vector<32x32xf32>
    %59 = arith.maximumf %57, %58 : vector<32x32xf32>
    %c48 = arith.constant 48 : index
    %c0_21 = arith.constant 0 : index
    %60 = vector.load %arg2[%c48, %c0_21] : memref<544x32xbf16, #tpu.memory_space<vmem>>, vector<32x32xbf16>
    %c2_i32_22 = arith.constant 2 : i32
    %61 = tpu.dynamic_rotate %59 by %c2_i32_22 dim 0 : vector<32x32xf32>, i32 -> vector<32x32xf32>
    %c2_i32_23 = arith.constant 2 : i32
    %62 = vector.broadcast %c2_i32_23 : i32 to vector<32x1xi32>
    %63 = arith.cmpi sge, %21, %62 : vector<32x1xi32>
    %cst_24 = arith.constant 0.000000e+00 : f32
    %64 = vector.shape_cast %63 : vector<32x1xi1> to vector<32x1xi1>
    %65 = vector.broadcast %64 : vector<32x1xi1> to vector<32x32xi1>
    %66 = vector.broadcast %cst_24 : f32 to vector<32x32xf32>
    %67 = arith.select %65, %61, %66 : vector<32x32xi1>, vector<32x32xf32>
    %68 = arith.truncf %67 : vector<32x32xf32> to vector<32x32xbf16>
    %cst_25 = arith.constant dense<0.000000e+00> : vector<32x32xf32>
    %69 = tpu.matmul %68, %60, %cst_25 {dimension_numbers = #tpu.dot_dimension_numbers<[1], [0], [0], [1], [0, 0, 1, 1], [], []>} : vector<32x32xbf16>, vector<32x32xbf16>, vector<32x32xf32> -> vector<32x32xf32>
    %c80 = arith.constant 80 : index
    %c0_26 = arith.constant 0 : index
    %70 = vector.load %arg2[%c80, %c0_26] : memref<544x32xbf16, #tpu.memory_space<vmem>>, vector<32x32xbf16>
    %c1_i32_27 = arith.constant 1 : i32
    %71 = tpu.dynamic_rotate %59 by %c1_i32_27 dim 0 : vector<32x32xf32>, i32 -> vector<32x32xf32>
    %c1_i32_28 = arith.constant 1 : i32
    %72 = vector.broadcast %c1_i32_28 : i32 to vector<32x1xi32>
    %73 = arith.cmpi sge, %21, %72 : vector<32x1xi32>
    %cst_29 = arith.constant 0.000000e+00 : f32
    %74 = vector.shape_cast %73 : vector<32x1xi1> to vector<32x1xi1>
    %75 = vector.broadcast %74 : vector<32x1xi1> to vector<32x32xi1>
    %76 = vector.broadcast %cst_29 : f32 to vector<32x32xf32>
    %77 = arith.select %75, %71, %76 : vector<32x32xi1>, vector<32x32xf32>
    %78 = arith.truncf %77 : vector<32x32xf32> to vector<32x32xbf16>
    %cst_30 = arith.constant dense<0.000000e+00> : vector<32x32xf32>
    %79 = tpu.matmul %78, %70, %cst_30 {dimension_numbers = #tpu.dot_dimension_numbers<[1], [0], [0], [1], [0, 0, 1, 1], [], []>} : vector<32x32xbf16>, vector<32x32xbf16>, vector<32x32xf32> -> vector<32x32xf32>
    %80 = arith.addf %69, %79 : vector<32x32xf32>
    %c112 = arith.constant 112 : index
    %c0_31 = arith.constant 0 : index
    %81 = vector.load %arg2[%c112, %c0_31] : memref<544x32xbf16, #tpu.memory_space<vmem>>, vector<32x32xbf16>
    %82 = arith.truncf %59 : vector<32x32xf32> to vector<32x32xbf16>
    %cst_32 = arith.constant dense<0.000000e+00> : vector<32x32xf32>
    %83 = tpu.matmul %82, %81, %cst_32 {dimension_numbers = #tpu.dot_dimension_numbers<[1], [0], [0], [1], [0, 0, 1, 1], [], []>} : vector<32x32xbf16>, vector<32x32xbf16>, vector<32x32xf32> -> vector<32x32xf32>
    %84 = arith.addf %80, %83 : vector<32x32xf32>
    %c448 = arith.constant 448 : index
    %c0_33 = arith.constant 0 : index
    %85 = vector.load %arg2[%c448, %c0_33] : memref<544x32xbf16, #tpu.memory_space<vmem>>, vector<1x32xbf16>
    %86 = arith.extf %85 : vector<1x32xbf16> to vector<1x32xf32>
    %87 = vector.broadcast %86 : vector<1x32xf32> to vector<32x32xf32>
    %88 = arith.addf %84, %87 : vector<32x32xf32>
    %cst_34 = arith.constant 0.000000e+00 : f32
    %89 = vector.broadcast %cst_34 : f32 to vector<32x32xf32>
    %90 = arith.maximumf %88, %89 : vector<32x32xf32>
    %c336 = arith.constant 336 : index
    %c0_35 = arith.constant 0 : index
    %91 = vector.load %arg2[%c336, %c0_35] : memref<544x32xbf16, #tpu.memory_space<vmem>>, vector<4x32xbf16>
    %92 = arith.truncf %4 : vector<32x4xf32> to vector<32x4xbf16>
    %cst_36 = arith.constant dense<0.000000e+00> : vector<32x32xf32>
    %93 = tpu.matmul %92, %91, %cst_36 {dimension_numbers = #tpu.dot_dimension_numbers<[1], [0], [0], [1], [0, 0, 1, 1], [], []>} : vector<32x4xbf16>, vector<4x32xbf16>, vector<32x32xf32> -> vector<32x32xf32>
    %c496 = arith.constant 496 : index
    %c0_37 = arith.constant 0 : index
    %94 = vector.load %arg2[%c496, %c0_37] : memref<544x32xbf16, #tpu.memory_space<vmem>>, vector<1x32xbf16>
    %95 = arith.extf %94 : vector<1x32xbf16> to vector<1x32xf32>
    %96 = vector.broadcast %95 : vector<1x32xf32> to vector<32x32xf32>
    %97 = arith.addf %93, %96 : vector<32x32xf32>
    %98 = arith.addf %90, %97 : vector<32x32xf32>
    %cst_38 = arith.constant 0.000000e+00 : f32
    %99 = vector.broadcast %cst_38 : f32 to vector<32x32xf32>
    %100 = arith.maximumf %98, %99 : vector<32x32xf32>
    %c144 = arith.constant 144 : index
    %c0_39 = arith.constant 0 : index
    %101 = vector.load %arg2[%c144, %c0_39] : memref<544x32xbf16, #tpu.memory_space<vmem>>, vector<32x32xbf16>
    %c4_i32 = arith.constant 4 : i32
    %102 = tpu.dynamic_rotate %100 by %c4_i32 dim 0 : vector<32x32xf32>, i32 -> vector<32x32xf32>
    %c4_i32_40 = arith.constant 4 : i32
    %103 = vector.broadcast %c4_i32_40 : i32 to vector<32x1xi32>
    %104 = arith.cmpi sge, %21, %103 : vector<32x1xi32>
    %cst_41 = arith.constant 0.000000e+00 : f32
    %105 = vector.shape_cast %104 : vector<32x1xi1> to vector<32x1xi1>
    %106 = vector.broadcast %105 : vector<32x1xi1> to vector<32x32xi1>
    %107 = vector.broadcast %cst_41 : f32 to vector<32x32xf32>
    %108 = arith.select %106, %102, %107 : vector<32x32xi1>, vector<32x32xf32>
    %109 = arith.truncf %108 : vector<32x32xf32> to vector<32x32xbf16>
    %cst_42 = arith.constant dense<0.000000e+00> : vector<32x32xf32>
    %110 = tpu.matmul %109, %101, %cst_42 {dimension_numbers = #tpu.dot_dimension_numbers<[1], [0], [0], [1], [0, 0, 1, 1], [], []>} : vector<32x32xbf16>, vector<32x32xbf16>, vector<32x32xf32> -> vector<32x32xf32>
    %c176 = arith.constant 176 : index
    %c0_43 = arith.constant 0 : index
    %111 = vector.load %arg2[%c176, %c0_43] : memref<544x32xbf16, #tpu.memory_space<vmem>>, vector<32x32xbf16>
    %c2_i32_44 = arith.constant 2 : i32
    %112 = tpu.dynamic_rotate %100 by %c2_i32_44 dim 0 : vector<32x32xf32>, i32 -> vector<32x32xf32>
    %c2_i32_45 = arith.constant 2 : i32
    %113 = vector.broadcast %c2_i32_45 : i32 to vector<32x1xi32>
    %114 = arith.cmpi sge, %21, %113 : vector<32x1xi32>
    %cst_46 = arith.constant 0.000000e+00 : f32
    %115 = vector.shape_cast %114 : vector<32x1xi1> to vector<32x1xi1>
    %116 = vector.broadcast %115 : vector<32x1xi1> to vector<32x32xi1>
    %117 = vector.broadcast %cst_46 : f32 to vector<32x32xf32>
    %118 = arith.select %116, %112, %117 : vector<32x32xi1>, vector<32x32xf32>
    %119 = arith.truncf %118 : vector<32x32xf32> to vector<32x32xbf16>
    %cst_47 = arith.constant dense<0.000000e+00> : vector<32x32xf32>
    %120 = tpu.matmul %119, %111, %cst_47 {dimension_numbers = #tpu.dot_dimension_numbers<[1], [0], [0], [1], [0, 0, 1, 1], [], []>} : vector<32x32xbf16>, vector<32x32xbf16>, vector<32x32xf32> -> vector<32x32xf32>
    %121 = arith.addf %110, %120 : vector<32x32xf32>
    %c208 = arith.constant 208 : index
    %c0_48 = arith.constant 0 : index
    %122 = vector.load %arg2[%c208, %c0_48] : memref<544x32xbf16, #tpu.memory_space<vmem>>, vector<32x32xbf16>
    %123 = arith.truncf %100 : vector<32x32xf32> to vector<32x32xbf16>
    %cst_49 = arith.constant dense<0.000000e+00> : vector<32x32xf32>
    %124 = tpu.matmul %123, %122, %cst_49 {dimension_numbers = #tpu.dot_dimension_numbers<[1], [0], [0], [1], [0, 0, 1, 1], [], []>} : vector<32x32xbf16>, vector<32x32xbf16>, vector<32x32xf32> -> vector<32x32xf32>
    %125 = arith.addf %121, %124 : vector<32x32xf32>
    %c464 = arith.constant 464 : index
    %c0_50 = arith.constant 0 : index
    %126 = vector.load %arg2[%c464, %c0_50] : memref<544x32xbf16, #tpu.memory_space<vmem>>, vector<1x32xbf16>
    %127 = arith.extf %126 : vector<1x32xbf16> to vector<1x32xf32>
    %128 = vector.broadcast %127 : vector<1x32xf32> to vector<32x32xf32>
    %129 = arith.addf %125, %128 : vector<32x32xf32>
    %cst_51 = arith.constant 0.000000e+00 : f32
    %130 = vector.broadcast %cst_51 : f32 to vector<32x32xf32>
    %131 = arith.maximumf %129, %130 : vector<32x32xf32>
    %c240 = arith.constant 240 : index
    %c0_52 = arith.constant 0 : index
    %132 = vector.load %arg2[%c240, %c0_52] : memref<544x32xbf16, #tpu.memory_space<vmem>>, vector<32x32xbf16>
    %c4_i32_53 = arith.constant 4 : i32
    %133 = tpu.dynamic_rotate %131 by %c4_i32_53 dim 0 : vector<32x32xf32>, i32 -> vector<32x32xf32>
    %c4_i32_54 = arith.constant 4 : i32
    %134 = vector.broadcast %c4_i32_54 : i32 to vector<32x1xi32>
    %135 = arith.cmpi sge, %21, %134 : vector<32x1xi32>
    %cst_55 = arith.constant 0.000000e+00 : f32
    %136 = vector.shape_cast %135 : vector<32x1xi1> to vector<32x1xi1>
    %137 = vector.broadcast %136 : vector<32x1xi1> to vector<32x32xi1>
    %138 = vector.broadcast %cst_55 : f32 to vector<32x32xf32>
    %139 = arith.select %137, %133, %138 : vector<32x32xi1>, vector<32x32xf32>
    %140 = arith.truncf %139 : vector<32x32xf32> to vector<32x32xbf16>
    %cst_56 = arith.constant dense<0.000000e+00> : vector<32x32xf32>
    %141 = tpu.matmul %140, %132, %cst_56 {dimension_numbers = #tpu.dot_dimension_numbers<[1], [0], [0], [1], [0, 0, 1, 1], [], []>} : vector<32x32xbf16>, vector<32x32xbf16>, vector<32x32xf32> -> vector<32x32xf32>
    %c272 = arith.constant 272 : index
    %c0_57 = arith.constant 0 : index
    %142 = vector.load %arg2[%c272, %c0_57] : memref<544x32xbf16, #tpu.memory_space<vmem>>, vector<32x32xbf16>
    %c2_i32_58 = arith.constant 2 : i32
    %143 = tpu.dynamic_rotate %131 by %c2_i32_58 dim 0 : vector<32x32xf32>, i32 -> vector<32x32xf32>
    %c2_i32_59 = arith.constant 2 : i32
    %144 = vector.broadcast %c2_i32_59 : i32 to vector<32x1xi32>
    %145 = arith.cmpi sge, %21, %144 : vector<32x1xi32>
    %cst_60 = arith.constant 0.000000e+00 : f32
    %146 = vector.shape_cast %145 : vector<32x1xi1> to vector<32x1xi1>
    %147 = vector.broadcast %146 : vector<32x1xi1> to vector<32x32xi1>
    %148 = vector.broadcast %cst_60 : f32 to vector<32x32xf32>
    %149 = arith.select %147, %143, %148 : vector<32x32xi1>, vector<32x32xf32>
    %150 = arith.truncf %149 : vector<32x32xf32> to vector<32x32xbf16>
    %cst_61 = arith.constant dense<0.000000e+00> : vector<32x32xf32>
    %151 = tpu.matmul %150, %142, %cst_61 {dimension_numbers = #tpu.dot_dimension_numbers<[1], [0], [0], [1], [0, 0, 1, 1], [], []>} : vector<32x32xbf16>, vector<32x32xbf16>, vector<32x32xf32> -> vector<32x32xf32>
    %152 = arith.addf %141, %151 : vector<32x32xf32>
    %c304 = arith.constant 304 : index
    %c0_62 = arith.constant 0 : index
    %153 = vector.load %arg2[%c304, %c0_62] : memref<544x32xbf16, #tpu.memory_space<vmem>>, vector<32x32xbf16>
    %154 = arith.truncf %131 : vector<32x32xf32> to vector<32x32xbf16>
    %cst_63 = arith.constant dense<0.000000e+00> : vector<32x32xf32>
    %155 = tpu.matmul %154, %153, %cst_63 {dimension_numbers = #tpu.dot_dimension_numbers<[1], [0], [0], [1], [0, 0, 1, 1], [], []>} : vector<32x32xbf16>, vector<32x32xbf16>, vector<32x32xf32> -> vector<32x32xf32>
    %156 = arith.addf %152, %155 : vector<32x32xf32>
    %c480 = arith.constant 480 : index
    %c0_64 = arith.constant 0 : index
    %157 = vector.load %arg2[%c480, %c0_64] : memref<544x32xbf16, #tpu.memory_space<vmem>>, vector<1x32xbf16>
    %158 = arith.extf %157 : vector<1x32xbf16> to vector<1x32xf32>
    %159 = vector.broadcast %158 : vector<1x32xf32> to vector<32x32xf32>
    %160 = arith.addf %156, %159 : vector<32x32xf32>
    %cst_65 = arith.constant 0.000000e+00 : f32
    %161 = vector.broadcast %cst_65 : f32 to vector<32x32xf32>
    %162 = arith.maximumf %160, %161 : vector<32x32xf32>
    %163 = arith.addf %162, %100 : vector<32x32xf32>
    %cst_66 = arith.constant 0.000000e+00 : f32
    %164 = vector.broadcast %cst_66 : f32 to vector<32x32xf32>
    %165 = arith.maximumf %163, %164 : vector<32x32xf32>
    %166 = vector.shape_cast %165 : vector<32x32xf32> to vector<2x16x32xf32>
    %cst_67 = arith.constant dense<0.000000e+00> : vector<2x32xf32>
    %167 = vector.multi_reduction <add>, %166, %cst_67 [1] : vector<2x16x32xf32> to vector<2x32xf32>
    %cst_68 = arith.constant 1.600000e+01 : f32
    %168 = vector.broadcast %cst_68 : f32 to vector<2x32xf32>
    %169 = arith.divf %167, %168 : vector<2x32xf32>
    %c352 = arith.constant 352 : index
    %c0_69 = arith.constant 0 : index
    %170 = vector.load %arg2[%c352, %c0_69] : memref<544x32xbf16, #tpu.memory_space<vmem>>, vector<32x32xbf16>
    %171 = arith.truncf %169 : vector<2x32xf32> to vector<2x32xbf16>
    %cst_70 = arith.constant dense<0.000000e+00> : vector<2x32xf32>
    %172 = tpu.matmul %171, %170, %cst_70 {dimension_numbers = #tpu.dot_dimension_numbers<[1], [0], [0], [1], [0, 0, 1, 1], [], []>} : vector<2x32xbf16>, vector<32x32xbf16>, vector<2x32xf32> -> vector<2x32xf32>
    %173 = arith.addf %172, %28 : vector<2x32xf32>
    %cst_71 = arith.constant 0.000000e+00 : f32
    %174 = vector.broadcast %cst_71 : f32 to vector<2x32xf32>
    %175 = arith.cmpf oge, %173, %174 : vector<2x32xf32>
    %cst_72 = arith.constant 0.00999999977 : f32
    %176 = vector.broadcast %cst_72 : f32 to vector<2x32xf32>
    %177 = arith.mulf %176, %173 : vector<2x32xf32>
    %178 = arith.select %175, %173, %177 : vector<2x32xi1>, vector<2x32xf32>
    %c400 = arith.constant 400 : index
    %c0_73 = arith.constant 0 : index
    %179 = vector.load %arg2[%c400, %c0_73] : memref<544x32xbf16, #tpu.memory_space<vmem>>, vector<32x32xbf16>
    %180 = arith.truncf %178 : vector<2x32xf32> to vector<2x32xbf16>
    %cst_74 = arith.constant dense<0.000000e+00> : vector<2x32xf32>
    %181 = tpu.matmul %180, %179, %cst_74 {dimension_numbers = #tpu.dot_dimension_numbers<[1], [0], [0], [1], [0, 0, 1, 1], [], []>} : vector<2x32xbf16>, vector<32x32xbf16>, vector<2x32xf32> -> vector<2x32xf32>
    %c528 = arith.constant 528 : index
    %c0_75 = arith.constant 0 : index
    %182 = vector.load %arg2[%c528, %c0_75] : memref<544x32xbf16, #tpu.memory_space<vmem>>, vector<1x32xbf16>
    %183 = arith.extf %182 : vector<1x32xbf16> to vector<1x32xf32>
    %184 = vector.broadcast %183 : vector<1x32xf32> to vector<2x32xf32>
    %185 = arith.addf %181, %184 : vector<2x32xf32>
    %c0_76 = arith.constant 0 : index
    %c0_77 = arith.constant 0 : index
    %186 = vector.load %arg3[%c0_76, %c0_77] : memref<2x32xf32, #tpu.memory_space<vmem>>, vector<2x32xf32>
    tpu.vector_store %arg3[%c0_76, %c0_77], %185 {strides = array<i32>} : memref<2x32xf32, #tpu.memory_space<vmem>>, vector<2x32xf32>,
    return
  }
  func.func @transform_0(%arg0: i32) -> (i32, i32, i32) {
    %c0_i32 = arith.constant 0 : i32
    %c0_i32_0 = arith.constant 0 : i32
    %c0_i32_1 = arith.constant 0 : i32
    return %arg0, %c0_i32, %c0_i32_0 : i32, i32, i32
  }
  func.func @transform_1(%arg0: i32) -> (i32, i32) {
    %c0_i32 = arith.constant 0 : i32
    %c0_i32_0 = arith.constant 0 : i32
    %c0_i32_1 = arith.constant 0 : i32
    return %c0_i32, %c0_i32_0 : i32, i32
  }
  func.func @transform_2(%arg0: i32) -> (i32, i32) {
    %c0_i32 = arith.constant 0 : i32
    %c0_i32_0 = arith.constant 0 : i32
    return %arg0, %c0_i32 : i32, i32
  }
}

</mosaic_0001>

<llo_original>
// kernel: spatial_regression_tcn_forward.1
$region0: #{spatial_regression_tcn_forward.1}
  #allocation0 [shape = 'u32[]', space=smem, size = 0x4, offset = 0x4, fixed_abs, tag = 'smem constant byte address 0x4 - core index']
  #allocation1 [shape = 'u32[144,128]{1,0:T(1,128)}', space=vmem, size = 0x12000, scoped, tag = 'internal scratch']
  %s0 = inlined_call_operand.vmem [shape: f32[2,16,12], index: 0, kind: input, shape index: {}]
  %s1 = inlined_call_operand.vmem [shape: bf16[544,32], index: 1, kind: input, shape index: {}]
  %s2 = inlined_call_operand.hbm [shape: f32[2,32], index: 2, kind: output, shape index: {}]
  %s3 = sld [smem:[#allocation0]]
  $region18: #{spatial_regression_tcn_forward.1} parent=0
    _
  %s5 = ssub.s32 1, %s3
  %s6 = scalar_select 0, %s5, %s3
  $region1: #{spatial_regression_tcn_forward.1} parent=0
    #allocation2 [shape = 'u8[1024]{0}', space=vmem, size = 0x400, scoped, tag = 'output window, operand 0, single buffered']
    #allocation3 [shape = 's32[1]{0}', space=sflag, size = 0x4, scoped, tag = 'scoped memory for spatial_regression_tcn_forward.1']
    %7 = vsyncpa [#allocation3], 0
    // Predicated region
    $region2: #{spatial_regression_tcn_forward.1} parent=1 // pred_check
      _
    $region3: #{spatial_regression_tcn_forward.1} parent=1 // pred_check_branch
      %9 = sbr.rel (0) target = $region5
    $region4: #{spatial_regression_tcn_forward.1} parent=1 // pred_region
      _
    $region5: #{spatial_regression_tcn_forward.1} parent=1 // pred_fallthru
      _
    // Predicated region
    $region6: #{spatial_regression_tcn_forward.1} parent=1 // pred_check
      _
    $region7: #{spatial_regression_tcn_forward.1} parent=1 // pred_check_branch
      %11 = sbr.rel (0) target = $region9
    $region8: #{spatial_regression_tcn_forward.1} parent=1 // pred_region
      _
    $region9: #{spatial_regression_tcn_forward.1} parent=1 // pred_fallthru
      _
    %v13 = vld [vmem:[%s0] sm:$0xff]
    %v14 = vld [vmem:[%s0 + $0x8] sm:$0xff]
    %v15 = vld [vmem:[%s0 + $0x10] sm:$0xff]
    %v16 = vld [vmem:[%s0 + $0x18] sm:$0xff]
    %v17 = vlaneseq
    %v18 = vshrl.u32 %v17, 7
    %v19 = vadd.s32 %v18, 8
    %v20 = vadd.s32 %v18, 16
    %v21 = vadd.s32 %v18, 24
    %vm22 = vcmp.lt.s32.totalorder %v18, 0
    %v23 = vsub.s32 0, %v18
    %v24 = vsel %vm22, %v23, %v18
    %v25 = vshrl.u32 %v24, 4
    %v26 = vand.u32 %v24, 15
    %v27 = vsub.s32 0, %v26
    %v28 = vsel %vm22, %v27, %v26
    %vm29 = vcmp.lt.s32.totalorder %v19, 0
    %v30 = vsub.s32 0, %v19
    %v31 = vsel %vm29, %v30, %v19
    %v32 = vshrl.u32 %v31, 4
    %v33 = vand.u32 %v31, 15
    %v34 = vsub.s32 0, %v33
    %v35 = vsel %vm29, %v34, %v33
    %vm36 = vcmp.lt.s32.totalorder %v20, 0
    %v37 = vsub.s32 0, %v20
    %v38 = vsel %vm36, %v37, %v20
    %v39 = vshrl.u32 %v38, 4
    %v40 = vand.u32 %v38, 15
    %v41 = vsub.s32 0, %v40
    %v42 = vsel %vm36, %v41, %v40
    %vm43 = vcmp.lt.s32.totalorder %v21, 0
    %v44 = vsub.s32 0, %v21
    %v45 = vsel %vm43, %v44, %v21
    %v46 = vshrl.u32 %v45, 4
    %v47 = vand.u32 %v45, 15
    %v48 = vsub.s32 0, %v47
    %v49 = vsel %vm43, %v48, %v47
    %vm50 = vcmp.ne.s32.totalorder %v28, 0
    %vm51 = vcmp.ne.s32.totalorder %v35, 0
    %vm52 = vcmp.ne.s32.totalorder %v42, 0
    %vm53 = vcmp.ne.s32.totalorder %v49, 0
    %vm54 = vcmp.lt.s32.totalorder %v28, 0
    %vm55 = vcmp.lt.s32.totalorder %v35, 0
    %vm56 = vcmp.lt.s32.totalorder %v42, 0
    %vm57 = vcmp.lt.s32.totalorder %v49, 0
    %vm58 = vmand %vm54, %vm50
    %vm59 = vmand %vm55, %vm51
    %vm60 = vmand %vm56, %vm52
    %vm61 = vmand %vm57, %vm53
    %v62 = vadd.s32 %v28, 16
    %v63 = vadd.s32 %v35, 16
    %v64 = vadd.s32 %v42, 16
    %v65 = vadd.s32 %v49, 16
    %v66 = vsel %vm58, %v62, %v28
    %v67 = vsel %vm59, %v63, %v35
    %v68 = vsel %vm60, %v64, %v42
    %v69 = vsel %vm61, %v65, %v49
    %v70 = vld [vmem:[%s1 + $0xc0] sm:$0xf]
    %v71 = vpack.c.bf16 %v13, %v13
    %v72 = vpack.c.bf16 %v15, %v15
    %v73 = vld [vmem:[%s1 + $0x100] sm:$0x1]
    %v74 = vunpack.c.l.bf16 %v73
    %v75 = vlaneseq
    %v76 = vshrl.u32 %v75, 7
    %v77 = vsub.s32 0, %v76
    %v78 = vrot.slane %v74, %v77
    %v81 = vunpack.c.l.b16 %v71
    %v82 = vunpack.c.l.b16 %v72
    %v83 = vrot.slane %v82, 7
    %vm84 = vcmask 1041409
    %v85 = vsel %vm84, %v83, %v81
    %v86 = vpack.c.b16 %v85, %v85
    %87 = vrot.lane.b32.xlu0 %v86, 124
    %v88 = vpop.permute.xlu0 %87
    %vm89 = vcmask 64512
    %v91 = vsel %vm89, %v88, 0
    %vm93 = vcmask 1043456
    %v95 = vsel %vm93, %v70, 0
    %97 = vmatprep.subr.bf16.mxu0 0
    %98 = vmatpush1.bf16.msra.mxu0 0
    %99 = vmatprep.subr.bf16.mxu0 0
    %100 = vmatpush1.bf16.msra.mxu0 0
    %101 = vmatprep.subr.bf16.mxu0 0
    %102 = vmatpush1.bf16.msra.mxu0 0
    %103 = vmatprep.subr.bf16.mxu0 0
    %104 = vmatpush1.bf16.msra.mxu0 0
    %105 = vmatprep.subr.bf16.mxu0 0
    %106 = vmatpush1.bf16.msra.mxu0 0
    %107 = vmatprep.subr.bf16.mxu0 0
    %108 = vmatpush1.bf16.msra.mxu0 0
    %109 = vmatprep.subr.bf16.mxu0 0
    %110 = vmatpush1.bf16.msra.mxu0 0
    %111 = vmatprep.subr.bf16.mxu0 0
    %112 = vmatpush1.bf16.msra.mxu0 %v95
    %113 = vmatprep.subr.bf16.mxu0 0
    %114 = vmatpush2.bf16.msra.mxu0 0
    %115 = vmatprep.subr.bf16.mxu0 0
    %116 = vmatpush2.bf16.msra.mxu0 0
    %117 = vmatprep.subr.bf16.mxu0 0
    %118 = vmatpush2.bf16.msra.mxu0 0
    %119 = vmatprep.subr.bf16.mxu0 0
    %120 = vmatpush2.bf16.msra.mxu0 0
    %121 = vmatprep.subr.bf16.mxu0 0
    %122 = vmatpush2.bf16.msra.mxu0 0
    %123 = vmatprep.subr.bf16.mxu0 0
    %124 = vmatpush2.bf16.msra.mxu0 0
    %125 = vmatprep.subr.bf16.mxu0 0
    %126 = vmatpush2.bf16.msra.mxu0 0
    %127 = vmatprep.subr.bf16.mxu0 0
    %128 = vmatpush2.bf16.msra.mxu0 0
    %129 = vmatprep.mubr.bf16.mxu0 0
    %130 = vmatmul.mubr.bf16.gmra.mxu0 %v91
    %v131 = vpop.f32.mrf.mxu0
    %v132 = vadd.f32 %v78, %v131
    %v133 = vpop.f32.mrf.mxu0
    %v134 = vpop.f32.mrf.mxu0
    %v135 = vpop.f32.mrf.mxu0
    %136 = vdwg.mxu0
    %v137 = vld [vmem:[%s1] sm:$0x3]
    %v138 = vrot.slane %v13, 6
    %v139 = vrot.slane %v14, 6
    %v140 = vrot.slane %v15, 6
    %v141 = vrot.slane %v16, 6
    %vm142 = vcmp.lt.s32.totalorder %v18, 2
    %v143 = vsel %vm142, %v140, %v141
    %v144 = vsel %vm142, %v139, %v140
    %v145 = vsel %vm142, %v138, %v139
    %v146 = vsel %vm142, %v141, %v138
    %vm147 = vcmp.ge.s32.totalorder %v66, 2
    %vm148 = vcmp.ge.s32.totalorder %v67, 2
    %vm149 = vcmp.ge.s32.totalorder %v68, 2
    %vm150 = vcmp.ge.s32.totalorder %v69, 2
    %v151 = vsel %vm147, 1, 0
    %v152 = vsel %vm148, 1, 0
    %v153 = vsel %vm149, 1, 0
    %v154 = vsel %vm150, 1, 0
    %vm155 = vcmp.eq.s32.totalorder %v151, 1
    %vm156 = vcmp.eq.s32.totalorder %v152, 1
    %vm157 = vcmp.eq.s32.totalorder %v153, 1
    %vm158 = vcmp.eq.s32.totalorder %v154, 1
    %v159 = vsel %vm155, %v146, 0.0
    %v160 = vsel %vm156, %v145, 0.0
    %v161 = vsel %vm157, %v144, 0.0
    %v162 = vsel %vm158, %v143, 0.0
    %v163 = vpack.c.bf16 %v160, %v159
    %v164 = vpack.c.bf16 %v162, %v161
    %v165 = vld [vmem:[%s1 + $0x8] sm:$0x3]
    %v166 = vrot.slane %v13, 7
    %v167 = vrot.slane %v14, 7
    %v168 = vrot.slane %v15, 7
    %v169 = vrot.slane %v16, 7
    %vm170 = vcmp.lt.s32.totalorder %v18, 1
    %v171 = vsel %vm170, %v168, %v169
    %v172 = vsel %vm170, %v167, %v168
    %v173 = vsel %vm170, %v166, %v167
    %v174 = vsel %vm170, %v169, %v166
    %vm175 = vcmp.ge.s32.totalorder %v66, 1
    %vm176 = vcmp.ge.s32.totalorder %v67, 1
    %vm177 = vcmp.ge.s32.totalorder %v68, 1
    %vm178 = vcmp.ge.s32.totalorder %v69, 1
    %v179 = vsel %vm175, 1, 0
    %v180 = vsel %vm176, 1, 0
    %v181 = vsel %vm177, 1, 0
    %v182 = vsel %vm178, 1, 0
    %vm183 = vcmp.eq.s32.totalorder %v179, 1
    %vm184 = vcmp.eq.s32.totalorder %v180, 1
    %vm185 = vcmp.eq.s32.totalorder %v181, 1
    %vm186 = vcmp.eq.s32.totalorder %v182, 1
    %v187 = vsel %vm183, %v174, 0.0
    %v188 = vsel %vm184, %v173, 0.0
    %v189 = vsel %vm185, %v172, 0.0
    %v190 = vsel %vm186, %v171, 0.0
    %v191 = vpack.c.bf16 %v188, %v187
    %v192 = vpack.c.bf16 %v190, %v189
    %vm193 = vcmask 31744
    %v195 = vsel %vm193, %v191, 0
    %v198 = vsel %vm193, %v192, 0
    %vm200 = vcmask 1041408
    %v202 = vsel %vm200, %v165, 0
    %204 = vmatprep.subr.bf16.mxu0 0
    %205 = vmatpush1.bf16.msra.mxu0 0
    %206 = vmatprep.subr.bf16.mxu0 0
    %207 = vmatpush1.bf16.msra.mxu0 0
    %208 = vmatprep.subr.bf16.mxu0 0
    %209 = vmatpush1.bf16.msra.mxu0 0
    %210 = vmatprep.subr.bf16.mxu0 0
    %211 = vmatpush1.bf16.msra.mxu0 0
    %212 = vmatprep.subr.bf16.mxu0 0
    %213 = vmatpush1.bf16.msra.mxu0 0
    %214 = vmatprep.subr.bf16.mxu0 0
    %215 = vmatpush1.bf16.msra.mxu0 0
    %216 = vmatprep.subr.bf16.mxu0 0
    %217 = vmatpush1.bf16.msra.mxu0 0
    %218 = vmatprep.subr.bf16.mxu0 0
    %219 = vmatpush1.bf16.msra.mxu0 %v202
    %220 = vmatprep.subr.bf16.mxu0 0
    %221 = vmatpush2.bf16.msra.mxu0 0
    %222 = vmatprep.subr.bf16.mxu0 0
    %223 = vmatpush2.bf16.msra.mxu0 0
    %224 = vmatprep.subr.bf16.mxu0 0
    %225 = vmatpush2.bf16.msra.mxu0 0
    %226 = vmatprep.subr.bf16.mxu0 0
    %227 = vmatpush2.bf16.msra.mxu0 0
    %228 = vmatprep.subr.bf16.mxu0 0
    %229 = vmatpush2.bf16.msra.mxu0 0
    %230 = vmatprep.subr.bf16.mxu0 0
    %231 = vmatpush2.bf16.msra.mxu0 0
    %232 = vmatprep.subr.bf16.mxu0 0
    %233 = vmatpush2.bf16.msra.mxu0 0
    %234 = vmatprep.subr.bf16.mxu0 0
    %235 = vmatpush2.bf16.msra.mxu0 0
    %236 = vmatprep.mubr.bf16.mxu0 0
    %237 = vmatmul.mubr.bf16.gmra.mxu0 %v195
    %v238 = vpop.f32.mrf.mxu0
    %v239 = vadd.f32 0.0, %v238
    %v240 = vpop.f32.mrf.mxu0
    %v241 = vpop.f32.mrf.mxu0
    %v242 = vadd.f32 0.0, %v241
    %v243 = vpop.f32.mrf.mxu0
    %244 = vmatprep.mubr.bf16.mxu0 0
    %245 = vmatmul.mubr.bf16.gmra.mxu0 %v198
    %v246 = vpop.f32.mrf.mxu0
    %v247 = vadd.f32 0.0, %v246
    %v248 = vpop.f32.mrf.mxu0
    %v249 = vpop.f32.mrf.mxu0
    %v250 = vadd.f32 0.0, %v249
    %v251 = vpop.f32.mrf.mxu0
    %252 = vdwg.mxu0
    %v254 = vsel %vm193, %v163, 0
    %v257 = vsel %vm193, %v164, 0
    %v260 = vsel %vm200, %v137, 0
    %262 = vmatprep.subr.bf16.mxu0 0
    %263 = vmatpush1.bf16.msra.mxu0 0
    %264 = vmatprep.subr.bf16.mxu0 0
    %265 = vmatpush1.bf16.msra.mxu0 0
    %266 = vmatprep.subr.bf16.mxu0 0
    %267 = vmatpush1.bf16.msra.mxu0 0
    %268 = vmatprep.subr.bf16.mxu0 0
    %269 = vmatpush1.bf16.msra.mxu0 0
    %270 = vmatprep.subr.bf16.mxu0 0
    %271 = vmatpush1.bf16.msra.mxu0 0
    %272 = vmatprep.subr.bf16.mxu0 0
    %273 = vmatpush1.bf16.msra.mxu0 0
    %274 = vmatprep.subr.bf16.mxu0 0
    %275 = vmatpush1.bf16.msra.mxu0 0
    %276 = vmatprep.subr.bf16.mxu0 0
    %277 = vmatpush1.bf16.msra.mxu0 %v260
    %278 = vmatprep.subr.bf16.mxu0 0
    %279 = vmatpush2.bf16.msra.mxu0 0
    %280 = vmatprep.subr.bf16.mxu0 0
    %281 = vmatpush2.bf16.msra.mxu0 0
    %282 = vmatprep.subr.bf16.mxu0 0
    %283 = vmatpush2.bf16.msra.mxu0 0
    %284 = vmatprep.subr.bf16.mxu0 0
    %285 = vmatpush2.bf16.msra.mxu0 0
    %286 = vmatprep.subr.bf16.mxu0 0
    %287 = vmatpush2.bf16.msra.mxu0 0
    %288 = vmatprep.subr.bf16.mxu0 0
    %289 = vmatpush2.bf16.msra.mxu0 0
    %290 = vmatprep.subr.bf16.mxu0 0
    %291 = vmatpush2.bf16.msra.mxu0 0
    %292 = vmatprep.subr.bf16.mxu0 0
    %293 = vmatpush2.bf16.msra.mxu0 0
    %294 = vmatprep.mubr.bf16.mxu0 0
    %295 = vmatmul.mubr.bf16.gmra.mxu0 %v254
    %v296 = vpop.f32.mrf.mxu0
    %v297 = vadd.f32 %v239, %v296
    %v298 = vpop.f32.mrf.mxu0
    %v299 = vpop.f32.mrf.mxu0
    %v300 = vadd.f32 %v242, %v299
    %v301 = vpop.f32.mrf.mxu0
    %302 = vmatprep.mubr.bf16.mxu0 0
    %303 = vmatmul.mubr.bf16.gmra.mxu0 %v257
    %v304 = vpop.f32.mrf.mxu0
    %v305 = vadd.f32 %v247, %v304
    %v306 = vpop.f32.mrf.mxu0
    %v307 = vpop.f32.mrf.mxu0
    %v308 = vadd.f32 %v250, %v307
    %v309 = vpop.f32.mrf.mxu0
    %310 = vdwg.mxu0
    %v311 = vld [vmem:[%s1 + $0x10] sm:$0x3]
    %v312 = vpack.c.bf16 %v14, %v13
    %v313 = vpack.c.bf16 %v16, %v15
    %v315 = vsel %vm193, %v312, 0
    %v318 = vsel %vm193, %v313, 0
    %v321 = vsel %vm200, %v311, 0
    %323 = vmatprep.subr.bf16.mxu0 0
    %324 = vmatpush1.bf16.msra.mxu0 0
    %325 = vmatprep.subr.bf16.mxu0 0
    %326 = vmatpush1.bf16.msra.mxu0 0
    %327 = vmatprep.subr.bf16.mxu0 0
    %328 = vmatpush1.bf16.msra.mxu0 0
    %329 = vmatprep.subr.bf16.mxu0 0
    %330 = vmatpush1.bf16.msra.mxu0 0
    %331 = vmatprep.subr.bf16.mxu0 0
    %332 = vmatpush1.bf16.msra.mxu0 0
    %333 = vmatprep.subr.bf16.mxu0 0
    %334 = vmatpush1.bf16.msra.mxu0 0
    %335 = vmatprep.subr.bf16.mxu0 0
    %336 = vmatpush1.bf16.msra.mxu0 0
    %337 = vmatprep.subr.bf16.mxu0 0
    %338 = vmatpush1.bf16.msra.mxu0 %v321
    %339 = vmatprep.subr.bf16.mxu0 0
    %340 = vmatpush2.bf16.msra.mxu0 0
    %341 = vmatprep.subr.bf16.mxu0 0
    %342 = vmatpush2.bf16.msra.mxu0 0
    %343 = vmatprep.subr.bf16.mxu0 0
    %344 = vmatpush2.bf16.msra.mxu0 0
    %345 = vmatprep.subr.bf16.mxu0 0
    %346 = vmatpush2.bf16.msra.mxu0 0
    %347 = vmatprep.subr.bf16.mxu0 0
    %348 = vmatpush2.bf16.msra.mxu0 0
    %349 = vmatprep.subr.bf16.mxu0 0
    %350 = vmatpush2.bf16.msra.mxu0 0
    %351 = vmatprep.subr.bf16.mxu0 0
    %352 = vmatpush2.bf16.msra.mxu0 0
    %353 = vmatprep.subr.bf16.mxu0 0
    %354 = vmatpush2.bf16.msra.mxu0 0
    %355 = vmatprep.mubr.bf16.mxu0 0
    %356 = vmatmul.mubr.bf16.gmra.mxu0 %v315
    %v357 = vpop.f32.mrf.mxu0
    %v358 = vadd.f32 0.0, %v357
    %v359 = vpop.f32.mrf.mxu0
    %v360 = vpop.f32.mrf.mxu0
    %v361 = vadd.f32 0.0, %v360
    %v362 = vpop.f32.mrf.mxu0
    %363 = vmatprep.mubr.bf16.mxu0 0
    %364 = vmatmul.mubr.bf16.gmra.mxu0 %v318
    %v365 = vpop.f32.mrf.mxu0
    %v366 = vadd.f32 0.0, %v365
    %v367 = vpop.f32.mrf.mxu0
    %v368 = vpop.f32.mrf.mxu0
    %v369 = vadd.f32 0.0, %v368
    %v370 = vpop.f32.mrf.mxu0
    %371 = vdwg.mxu0
    %v372 = vadd.f32 %v297, %v358
    %v373 = vadd.f32 %v300, %v361
    %v374 = vadd.f32 %v305, %v366
    %v375 = vadd.f32 %v308, %v369
    %v376 = vld [vmem:[%s1 + $0xd8] sm:$0x1]
    %v377 = vunpack.c.l.bf16 %v376
    %v378 = vlaneseq
    %v379 = vshrl.u32 %v378, 7
    %v380 = vsub.s32 0, %v379
    %v381 = vrot.slane %v377, %v380
    %v382 = vadd.f32 %v372, %v381
    %v383 = vadd.f32 %v373, %v381
    %v384 = vadd.f32 %v374, %v381
    %v385 = vadd.f32 %v375, %v381
    %v386 = vmax.f32 %v382, 0.0
    %v387 = vmax.f32 %v383, 0.0
    %v388 = vmax.f32 %v384, 0.0
    %v389 = vmax.f32 %v385, 0.0
    %v390 = vld [vmem:[%s1 + $0x18] sm:$0xf]
    %v391 = vld [vmem:[%s1 + $0x1c] sm:$0xf]
    %v392 = vld [vmem:[%s1 + $0x20] sm:$0xf]
    %v393 = vld [vmem:[%s1 + $0x24] sm:$0xf]
    %v394 = vrot.slane %v386, 6
    %v395 = vrot.slane %v387, 6
    %v396 = vrot.slane %v388, 6
    %v397 = vrot.slane %v389, 6
    %v398 = vsel %vm142, %v396, %v397
    %v399 = vsel %vm142, %v395, %v396
    %v400 = vsel %vm142, %v394, %v395
    %v401 = vsel %vm142, %v397, %v394
    %v402 = vsel %vm155, %v401, 0.0
    %v403 = vsel %vm156, %v400, 0.0
    %v404 = vsel %vm157, %v399, 0.0
    %v405 = vsel %vm158, %v398, 0.0
    %v406 = vpack.c.bf16 %v403, %v402
    %v407 = vpack.c.bf16 %v405, %v404
    %v408 = vld [vmem:[%s1 + $0x28] sm:$0xf]
    %v409 = vld [vmem:[%s1 + $0x2c] sm:$0xf]
    %v410 = vld [vmem:[%s1 + $0x30] sm:$0xf]
    %v411 = vld [vmem:[%s1 + $0x34] sm:$0xf]
    %v412 = vrot.slane %v386, 7
    %v413 = vrot.slane %v387, 7
    %v414 = vrot.slane %v388, 7
    %v415 = vrot.slane %v389, 7
    %v416 = vsel %vm170, %v414, %v415
    %v417 = vsel %vm170, %v413, %v414
    %v418 = vsel %vm170, %v412, %v413
    %v419 = vsel %vm170, %v415, %v412
    %v420 = vsel %vm183, %v419, 0.0
    %v421 = vsel %vm184, %v418, 0.0
    %v422 = vsel %vm185, %v417, 0.0
    %v423 = vsel %vm186, %v416, 0.0
    %v424 = vpack.c.bf16 %v421, %v420
    %v425 = vpack.c.bf16 %v423, %v422
    %v430 = vunpack.c.l.b16 %v408
    %v431 = vunpack.c.l.b16 %v409
    %v432 = vunpack.c.l.b16 %v410
    %v433 = vunpack.c.l.b16 %v411
    %v434 = vpack.c.b16 %v431, %v430
    %v435 = vpack.c.b16 %v433, %v432
    %vm438 = vcmask 261120
    %v440 = vsel %vm438, %v424, 0
    %v443 = vsel %vm438, %v425, 0
    %445 = vmatprep.subr.bf16.mxu0 0
    %446 = vmatpush1.bf16.msra.mxu0 0
    %447 = vmatprep.subr.bf16.mxu0 0
    %448 = vmatpush1.bf16.msra.mxu0 0
    %449 = vmatprep.subr.bf16.mxu0 0
    %450 = vmatpush1.bf16.msra.mxu0 0
    %451 = vmatprep.subr.bf16.mxu0 0
    %452 = vmatpush1.bf16.msra.mxu0 0
    %453 = vmatprep.subr.bf16.mxu0 0
    %454 = vmatpush1.bf16.msra.mxu0 0
    %455 = vmatprep.subr.bf16.mxu0 0
    %456 = vmatpush1.bf16.msra.mxu0 0
    %457 = vmatprep.subr.bf16.mxu0 0
    %458 = vmatpush1.bf16.msra.mxu0 %v435
    %459 = vmatprep.subr.bf16.mxu0 0
    %460 = vmatpush1.bf16.msra.mxu0 %v434
    %461 = vmatprep.subr.bf16.mxu0 0
    %462 = vmatpush2.bf16.msra.mxu0 0
    %463 = vmatprep.subr.bf16.mxu0 0
    %464 = vmatpush2.bf16.msra.mxu0 0
    %465 = vmatprep.subr.bf16.mxu0 0
    %466 = vmatpush2.bf16.msra.mxu0 0
    %467 = vmatprep.subr.bf16.mxu0 0
    %468 = vmatpush2.bf16.msra.mxu0 0
    %469 = vmatprep.subr.bf16.mxu0 0
    %470 = vmatpush2.bf16.msra.mxu0 0
    %471 = vmatprep.subr.bf16.mxu0 0
    %472 = vmatpush2.bf16.msra.mxu0 0
    %473 = vmatprep.subr.bf16.mxu0 0
    %474 = vmatpush2.bf16.msra.mxu0 0
    %475 = vmatprep.subr.bf16.mxu0 0
    %476 = vmatpush2.bf16.msra.mxu0 0
    %477 = vmatprep.mubr.bf16.mxu0 0
    %478 = vmatmul.mubr.bf16.gmra.mxu0 %v440
    %v479 = vpop.f32.mrf.mxu0
    %v480 = vadd.f32 0.0, %v479
    %v481 = vpop.f32.mrf.mxu0
    %v482 = vpop.f32.mrf.mxu0
    %v483 = vadd.f32 0.0, %v482
    %v484 = vpop.f32.mrf.mxu0
    %485 = vmatprep.mubr.bf16.mxu0 0
    %486 = vmatmul.mubr.bf16.gmra.mxu0 %v443
    %v487 = vpop.f32.mrf.mxu0
    %v488 = vadd.f32 0.0, %v487
    %v489 = vpop.f32.mrf.mxu0
    %v490 = vpop.f32.mrf.mxu0
    %v491 = vadd.f32 0.0, %v490
    %v492 = vpop.f32.mrf.mxu0
    %493 = vdwg.mxu0
    %v498 = vunpack.c.l.b16 %v390
    %v499 = vunpack.c.l.b16 %v391
    %v500 = vunpack.c.l.b16 %v392
    %v501 = vunpack.c.l.b16 %v393
    %v502 = vpack.c.b16 %v499, %v498
    %v503 = vpack.c.b16 %v501, %v500
    %v507 = vsel %vm438, %v406, 0
    %v510 = vsel %vm438, %v407, 0
    %512 = vmatprep.subr.bf16.mxu0 0
    %513 = vmatpush1.bf16.msra.mxu0 0
    %514 = vmatprep.subr.bf16.mxu0 0
    %515 = vmatpush1.bf16.msra.mxu0 0
    %516 = vmatprep.subr.bf16.mxu0 0
    %517 = vmatpush1.bf16.msra.mxu0 0
    %518 = vmatprep.subr.bf16.mxu0 0
    %519 = vmatpush1.bf16.msra.mxu0 0
    %520 = vmatprep.subr.bf16.mxu0 0
    %521 = vmatpush1.bf16.msra.mxu0 0
    %522 = vmatprep.subr.bf16.mxu0 0
    %523 = vmatpush1.bf16.msra.mxu0 0
    %524 = vmatprep.subr.bf16.mxu0 0
    %525 = vmatpush1.bf16.msra.mxu0 %v503
    %526 = vmatprep.subr.bf16.mxu0 0
    %527 = vmatpush1.bf16.msra.mxu0 %v502
    %528 = vmatprep.subr.bf16.mxu0 0
    %529 = vmatpush2.bf16.msra.mxu0 0
    %530 = vmatprep.subr.bf16.mxu0 0
    %531 = vmatpush2.bf16.msra.mxu0 0
    %532 = vmatprep.subr.bf16.mxu0 0
    %533 = vmatpush2.bf16.msra.mxu0 0
    %534 = vmatprep.subr.bf16.mxu0 0
    %535 = vmatpush2.bf16.msra.mxu0 0
    %536 = vmatprep.subr.bf16.mxu0 0
    %537 = vmatpush2.bf16.msra.mxu0 0
    %538 = vmatprep.subr.bf16.mxu0 0
    %539 = vmatpush2.bf16.msra.mxu0 0
    %540 = vmatprep.subr.bf16.mxu0 0
    %541 = vmatpush2.bf16.msra.mxu0 0
    %542 = vmatprep.subr.bf16.mxu0 0
    %543 = vmatpush2.bf16.msra.mxu0 0
    %544 = vmatprep.mubr.bf16.mxu0 0
    %545 = vmatmul.mubr.bf16.gmra.mxu0 %v507
    %v546 = vpop.f32.mrf.mxu0
    %v547 = vadd.f32 %v480, %v546
    %v548 = vpop.f32.mrf.mxu0
    %v549 = vpop.f32.mrf.mxu0
    %v550 = vadd.f32 %v483, %v549
    %v551 = vpop.f32.mrf.mxu0
    %552 = vmatprep.mubr.bf16.mxu0 0
    %553 = vmatmul.mubr.bf16.gmra.mxu0 %v510
    %v554 = vpop.f32.mrf.mxu0
    %v555 = vadd.f32 %v488, %v554
    %v556 = vpop.f32.mrf.mxu0
    %v557 = vpop.f32.mrf.mxu0
    %v558 = vadd.f32 %v491, %v557
    %v559 = vpop.f32.mrf.mxu0
    %560 = vdwg.mxu0
    %v561 = vld [vmem:[%s1 + $0x38] sm:$0xf]
    %v562 = vld [vmem:[%s1 + $0x3c] sm:$0xf]
    %v563 = vld [vmem:[%s1 + $0x40] sm:$0xf]
    %v564 = vld [vmem:[%s1 + $0x44] sm:$0xf]
    %v565 = vpack.c.bf16 %v387, %v386
    %v566 = vpack.c.bf16 %v389, %v388
    %v571 = vunpack.c.l.b16 %v561
    %v572 = vunpack.c.l.b16 %v562
    %v573 = vunpack.c.l.b16 %v563
    %v574 = vunpack.c.l.b16 %v564
    %v575 = vpack.c.b16 %v572, %v571
    %v576 = vpack.c.b16 %v574, %v573
    %v580 = vsel %vm438, %v565, 0
    %v583 = vsel %vm438, %v566, 0
    %585 = vmatprep.subr.bf16.mxu0 0
    %586 = vmatpush1.bf16.msra.mxu0 0
    %587 = vmatprep.subr.bf16.mxu0 0
    %588 = vmatpush1.bf16.msra.mxu0 0
    %589 = vmatprep.subr.bf16.mxu0 0
    %590 = vmatpush1.bf16.msra.mxu0 0
    %591 = vmatprep.subr.bf16.mxu0 0
    %592 = vmatpush1.bf16.msra.mxu0 0
    %593 = vmatprep.subr.bf16.mxu0 0
    %594 = vmatpush1.bf16.msra.mxu0 0
    %595 = vmatprep.subr.bf16.mxu0 0
    %596 = vmatpush1.bf16.msra.mxu0 0
    %597 = vmatprep.subr.bf16.mxu0 0
    %598 = vmatpush1.bf16.msra.mxu0 %v576
    %599 = vmatprep.subr.bf16.mxu0 0
    %600 = vmatpush1.bf16.msra.mxu0 %v575
    %601 = vmatprep.subr.bf16.mxu0 0
    %602 = vmatpush2.bf16.msra.mxu0 0
    %603 = vmatprep.subr.bf16.mxu0 0
    %604 = vmatpush2.bf16.msra.mxu0 0
    %605 = vmatprep.subr.bf16.mxu0 0
    %606 = vmatpush2.bf16.msra.mxu0 0
    %607 = vmatprep.subr.bf16.mxu0 0
    %608 = vmatpush2.bf16.msra.mxu0 0
    %609 = vmatprep.subr.bf16.mxu0 0
    %610 = vmatpush2.bf16.msra.mxu0 0
    %611 = vmatprep.subr.bf16.mxu0 0
    %612 = vmatpush2.bf16.msra.mxu0 0
    %613 = vmatprep.subr.bf16.mxu0 0
    %614 = vmatpush2.bf16.msra.mxu0 0
    %615 = vmatprep.subr.bf16.mxu0 0
    %616 = vmatpush2.bf16.msra.mxu0 0
    %617 = vmatprep.mubr.bf16.mxu0 0
    %618 = vmatmul.mubr.bf16.gmra.mxu0 %v580
    %v619 = vpop.f32.mrf.mxu0
    %v620 = vadd.f32 0.0, %v619
    %v621 = vpop.f32.mrf.mxu0
    %v622 = vpop.f32.mrf.mxu0
    %v623 = vadd.f32 0.0, %v622
    %v624 = vpop.f32.mrf.mxu0
    %625 = vmatprep.mubr.bf16.mxu0 0
    %626 = vmatmul.mubr.bf16.gmra.mxu0 %v583
    %v627 = vpop.f32.mrf.mxu0
    %v628 = vadd.f32 0.0, %v627
    %v629 = vpop.f32.mrf.mxu0
    %v630 = vpop.f32.mrf.mxu0
    %v631 = vadd.f32 0.0, %v630
    %v632 = vpop.f32.mrf.mxu0
    %633 = vdwg.mxu0
    %v634 = vadd.f32 %v547, %v620
    %v635 = vadd.f32 %v550, %v623
    %v636 = vadd.f32 %v555, %v628
    %v637 = vadd.f32 %v558, %v631
    %v638 = vld [vmem:[%s1 + $0xe0] sm:$0x1]
    %v639 = vunpack.c.l.bf16 %v638
    %v640 = vlaneseq
    %v641 = vshrl.u32 %v640, 7
    %v642 = vsub.s32 0, %v641
    %v643 = vrot.slane %v639, %v642
    %v644 = vadd.f32 %v634, %v643
    %v645 = vadd.f32 %v635, %v643
    %v646 = vadd.f32 %v636, %v643
    %v647 = vadd.f32 %v637, %v643
    %v648 = vmax.f32 %v644, 0.0
    %v649 = vmax.f32 %v645, 0.0
    %v650 = vmax.f32 %v646, 0.0
    %v651 = vmax.f32 %v647, 0.0
    %v652 = vld [vmem:[%s1 + $0xa8] sm:$0x3]
    %v653 = vld [vmem:[%s1 + $0xf8] sm:$0x1]
    %v654 = vunpack.c.l.bf16 %v653
    %v655 = vlaneseq
    %v656 = vshrl.u32 %v655, 7
    %v657 = vsub.s32 0, %v656
    %v658 = vrot.slane %v654, %v657
    %v660 = vsel %vm200, %v652, 0
    %662 = vmatprep.subr.bf16.mxu0 0
    %663 = vmatpush1.bf16.msra.mxu0 0
    %664 = vmatprep.subr.bf16.mxu0 0
    %665 = vmatpush1.bf16.msra.mxu0 0
    %666 = vmatprep.subr.bf16.mxu0 0
    %667 = vmatpush1.bf16.msra.mxu0 0
    %668 = vmatprep.subr.bf16.mxu0 0
    %669 = vmatpush1.bf16.msra.mxu0 0
    %670 = vmatprep.subr.bf16.mxu0 0
    %671 = vmatpush1.bf16.msra.mxu0 0
    %672 = vmatprep.subr.bf16.mxu0 0
    %673 = vmatpush1.bf16.msra.mxu0 0
    %674 = vmatprep.subr.bf16.mxu0 0
    %675 = vmatpush1.bf16.msra.mxu0 0
    %676 = vmatprep.subr.bf16.mxu0 0
    %677 = vmatpush1.bf16.msra.mxu0 %v660
    %678 = vmatprep.subr.bf16.mxu0 0
    %679 = vmatpush2.bf16.msra.mxu0 0
    %680 = vmatprep.subr.bf16.mxu0 0
    %681 = vmatpush2.bf16.msra.mxu0 0
    %682 = vmatprep.subr.bf16.mxu0 0
    %683 = vmatpush2.bf16.msra.mxu0 0
    %684 = vmatprep.subr.bf16.mxu0 0
    %685 = vmatpush2.bf16.msra.mxu0 0
    %686 = vmatprep.subr.bf16.mxu0 0
    %687 = vmatpush2.bf16.msra.mxu0 0
    %688 = vmatprep.subr.bf16.mxu0 0
    %689 = vmatpush2.bf16.msra.mxu0 0
    %690 = vmatprep.subr.bf16.mxu0 0
    %691 = vmatpush2.bf16.msra.mxu0 0
    %692 = vmatprep.subr.bf16.mxu0 0
    %693 = vmatpush2.bf16.msra.mxu0 0
    %694 = vmatprep.mubr.bf16.mxu0 0
    %695 = vmatmul.mubr.bf16.gmra.mxu0 %v315
    %v696 = vpop.f32.mrf.mxu0
    %v697 = vadd.f32 %v658, %v696
    %v698 = vpop.f32.mrf.mxu0
    %v699 = vpop.f32.mrf.mxu0
    %v700 = vadd.f32 %v658, %v699
    %v701 = vpop.f32.mrf.mxu0
    %702 = vmatprep.mubr.bf16.mxu0 0
    %703 = vmatmul.mubr.bf16.gmra.mxu0 %v318
    %v704 = vpop.f32.mrf.mxu0
    %v705 = vadd.f32 %v658, %v704
    %v706 = vpop.f32.mrf.mxu0
    %v707 = vpop.f32.mrf.mxu0
    %v708 = vadd.f32 %v658, %v707
    %v709 = vpop.f32.mrf.mxu0
    %710 = vdwg.mxu0
    %v711 = vadd.f32 %v648, %v697
    %v712 = vadd.f32 %v649, %v700
    %v713 = vadd.f32 %v650, %v705
    %v714 = vadd.f32 %v651, %v708
    %v715 = vmax.f32 %v711, 0.0
    %v716 = vmax.f32 %v712, 0.0
    %v717 = vmax.f32 %v713, 0.0
    %v718 = vmax.f32 %v714, 0.0
    %v719 = vld [vmem:[%s1 + $0x48] sm:$0xf]
    %v720 = vld [vmem:[%s1 + $0x4c] sm:$0xf]
    %v721 = vld [vmem:[%s1 + $0x50] sm:$0xf]
    %v722 = vld [vmem:[%s1 + $0x54] sm:$0xf]
    %v723 = vrot.slane %v715, 4
    %v724 = vrot.slane %v716, 4
    %v725 = vrot.slane %v717, 4
    %v726 = vrot.slane %v718, 4
    %vm727 = vcmp.lt.s32.totalorder %v18, 4
    %v728 = vsel %vm727, %v725, %v726
    %v729 = vsel %vm727, %v724, %v725
    %v730 = vsel %vm727, %v723, %v724
    %v731 = vsel %vm727, %v726, %v723
    %vm732 = vcmp.ge.s32.totalorder %v66, 4
    %vm733 = vcmp.ge.s32.totalorder %v67, 4
    %vm734 = vcmp.ge.s32.totalorder %v68, 4
    %vm735 = vcmp.ge.s32.totalorder %v69, 4
    %v736 = vsel %vm732, 1, 0
    %v737 = vsel %vm733, 1, 0
    %v738 = vsel %vm734, 1, 0
    %v739 = vsel %vm735, 1, 0
    %vm740 = vcmp.eq.s32.totalorder %v736, 1
    %vm741 = vcmp.eq.s32.totalorder %v737, 1
    %vm742 = vcmp.eq.s32.totalorder %v738, 1
    %vm743 = vcmp.eq.s32.totalorder %v739, 1
    %v744 = vsel %vm740, %v731, 0.0
    %v745 = vsel %vm741, %v730, 0.0
    %v746 = vsel %vm742, %v729, 0.0
    %v747 = vsel %vm743, %v728, 0.0
    %v748 = vpack.c.bf16 %v745, %v744
    %v749 = vpack.c.bf16 %v747, %v746
    %v750 = vld [vmem:[%s1 + $0x58] sm:$0xf]
    %v751 = vld [vmem:[%s1 + $0x5c] sm:$0xf]
    %v752 = vld [vmem:[%s1 + $0x60] sm:$0xf]
    %v753 = vld [vmem:[%s1 + $0x64] sm:$0xf]
    %v754 = vrot.slane %v715, 6
    %v755 = vrot.slane %v716, 6
    %v756 = vrot.slane %v717, 6
    %v757 = vrot.slane %v718, 6
    %v758 = vsel %vm142, %v756, %v757
    %v759 = vsel %vm142, %v755, %v756
    %v760 = vsel %vm142, %v754, %v755
    %v761 = vsel %vm142, %v757, %v754
    %v762 = vsel %vm155, %v761, 0.0
    %v763 = vsel %vm156, %v760, 0.0
    %v764 = vsel %vm157, %v759, 0.0
    %v765 = vsel %vm158, %v758, 0.0
    %v766 = vpack.c.bf16 %v763, %v762
    %v767 = vpack.c.bf16 %v765, %v764
    %v772 = vunpack.c.l.b16 %v750
    %v773 = vunpack.c.l.b16 %v751
    %v774 = vunpack.c.l.b16 %v752
    %v775 = vunpack.c.l.b16 %v753
    %v776 = vpack.c.b16 %v773, %v772
    %v777 = vpack.c.b16 %v775, %v774
    %v781 = vsel %vm438, %v766, 0
    %v784 = vsel %vm438, %v767, 0
    %786 = vmatprep.subr.bf16.mxu0 0
    %787 = vmatpush1.bf16.msra.mxu0 0
    %788 = vmatprep.subr.bf16.mxu0 0
    %789 = vmatpush1.bf16.msra.mxu0 0
    %790 = vmatprep.subr.bf16.mxu0 0
    %791 = vmatpush1.bf16.msra.mxu0 0
    %792 = vmatprep.subr.bf16.mxu0 0
    %793 = vmatpush1.bf16.msra.mxu0 0
    %794 = vmatprep.subr.bf16.mxu0 0
    %795 = vmatpush1.bf16.msra.mxu0 0
    %796 = vmatprep.subr.bf16.mxu0 0
    %797 = vmatpush1.bf16.msra.mxu0 0
    %798 = vmatprep.subr.bf16.mxu0 0
    %799 = vmatpush1.bf16.msra.mxu0 %v777
    %800 = vmatprep.subr.bf16.mxu0 0
    %801 = vmatpush1.bf16.msra.mxu0 %v776
    %802 = vmatprep.subr.bf16.mxu0 0
    %803 = vmatpush2.bf16.msra.mxu0 0
    %804 = vmatprep.subr.bf16.mxu0 0
    %805 = vmatpush2.bf16.msra.mxu0 0
    %806 = vmatprep.subr.bf16.mxu0 0
    %807 = vmatpush2.bf16.msra.mxu0 0
    %808 = vmatprep.subr.bf16.mxu0 0
    %809 = vmatpush2.bf16.msra.mxu0 0
    %810 = vmatprep.subr.bf16.mxu0 0
    %811 = vmatpush2.bf16.msra.mxu0 0
    %812 = vmatprep.subr.bf16.mxu0 0
    %813 = vmatpush2.bf16.msra.mxu0 0
    %814 = vmatprep.subr.bf16.mxu0 0
    %815 = vmatpush2.bf16.msra.mxu0 0
    %816 = vmatprep.subr.bf16.mxu0 0
    %817 = vmatpush2.bf16.msra.mxu0 0
    %818 = vmatprep.mubr.bf16.mxu0 0
    %819 = vmatmul.mubr.bf16.gmra.mxu0 %v781
    %v820 = vpop.f32.mrf.mxu0
    %v821 = vadd.f32 0.0, %v820
    %v822 = vpop.f32.mrf.mxu0
    %v823 = vpop.f32.mrf.mxu0
    %v824 = vadd.f32 0.0, %v823
    %v825 = vpop.f32.mrf.mxu0
    %826 = vmatprep.mubr.bf16.mxu0 0
    %827 = vmatmul.mubr.bf16.gmra.mxu0 %v784
    %v828 = vpop.f32.mrf.mxu0
    %v829 = vadd.f32 0.0, %v828
    %v830 = vpop.f32.mrf.mxu0
    %v831 = vpop.f32.mrf.mxu0
    %v832 = vadd.f32 0.0, %v831
    %v833 = vpop.f32.mrf.mxu0
    %834 = vdwg.mxu0
    %v839 = vunpack.c.l.b16 %v719
    %v840 = vunpack.c.l.b16 %v720
    %v841 = vunpack.c.l.b16 %v721
    %v842 = vunpack.c.l.b16 %v722
    %v843 = vpack.c.b16 %v840, %v839
    %v844 = vpack.c.b16 %v842, %v841
    %v848 = vsel %vm438, %v748, 0
    %v851 = vsel %vm438, %v749, 0
    %853 = vmatprep.subr.bf16.mxu0 0
    %854 = vmatpush1.bf16.msra.mxu0 0
    %855 = vmatprep.subr.bf16.mxu0 0
    %856 = vmatpush1.bf16.msra.mxu0 0
    %857 = vmatprep.subr.bf16.mxu0 0
    %858 = vmatpush1.bf16.msra.mxu0 0
    %859 = vmatprep.subr.bf16.mxu0 0
    %860 = vmatpush1.bf16.msra.mxu0 0
    %861 = vmatprep.subr.bf16.mxu0 0
    %862 = vmatpush1.bf16.msra.mxu0 0
    %863 = vmatprep.subr.bf16.mxu0 0
    %864 = vmatpush1.bf16.msra.mxu0 0
    %865 = vmatprep.subr.bf16.mxu0 0
    %866 = vmatpush1.bf16.msra.mxu0 %v844
    %867 = vmatprep.subr.bf16.mxu0 0
    %868 = vmatpush1.bf16.msra.mxu0 %v843
    %869 = vmatprep.subr.bf16.mxu0 0
    %870 = vmatpush2.bf16.msra.mxu0 0
    %871 = vmatprep.subr.bf16.mxu0 0
    %872 = vmatpush2.bf16.msra.mxu0 0
    %873 = vmatprep.subr.bf16.mxu0 0
    %874 = vmatpush2.bf16.msra.mxu0 0
    %875 = vmatprep.subr.bf16.mxu0 0
    %876 = vmatpush2.bf16.msra.mxu0 0
    %877 = vmatprep.subr.bf16.mxu0 0
    %878 = vmatpush2.bf16.msra.mxu0 0
    %879 = vmatprep.subr.bf16.mxu0 0
    %880 = vmatpush2.bf16.msra.mxu0 0
    %881 = vmatprep.subr.bf16.mxu0 0
    %882 = vmatpush2.bf16.msra.mxu0 0
    %883 = vmatprep.subr.bf16.mxu0 0
    %884 = vmatpush2.bf16.msra.mxu0 0
    %885 = vmatprep.mubr.bf16.mxu0 0
    %886 = vmatmul.mubr.bf16.gmra.mxu0 %v848
    %v887 = vpop.f32.mrf.mxu0
    %v888 = vadd.f32 %v821, %v887
    %v889 = vpop.f32.mrf.mxu0
    %v890 = vpop.f32.mrf.mxu0
    %v891 = vadd.f32 %v824, %v890
    %v892 = vpop.f32.mrf.mxu0
    %893 = vmatprep.mubr.bf16.mxu0 0
    %894 = vmatmul.mubr.bf16.gmra.mxu0 %v851
    %v895 = vpop.f32.mrf.mxu0
    %v896 = vadd.f32 %v829, %v895
    %v897 = vpop.f32.mrf.mxu0
    %v898 = vpop.f32.mrf.mxu0
    %v899 = vadd.f32 %v832, %v898
    %v900 = vpop.f32.mrf.mxu0
    %901 = vdwg.mxu0
    %v902 = vld [vmem:[%s1 + $0x68] sm:$0xf]
    %v903 = vld [vmem:[%s1 + $0x6c] sm:$0xf]
    %v904 = vld [vmem:[%s1 + $0x70] sm:$0xf]
    %v905 = vld [vmem:[%s1 + $0x74] sm:$0xf]
    %v906 = vpack.c.bf16 %v716, %v715
    %v907 = vpack.c.bf16 %v718, %v717
    %v912 = vunpack.c.l.b16 %v902
    %v913 = vunpack.c.l.b16 %v903
    %v914 = vunpack.c.l.b16 %v904
    %v915 = vunpack.c.l.b16 %v905
    %v916 = vpack.c.b16 %v913, %v912
    %v917 = vpack.c.b16 %v915, %v914
    %v921 = vsel %vm438, %v906, 0
    %v924 = vsel %vm438, %v907, 0
    %926 = vmatprep.subr.bf16.mxu0 0
    %927 = vmatpush1.bf16.msra.mxu0 0
    %928 = vmatprep.subr.bf16.mxu0 0
    %929 = vmatpush1.bf16.msra.mxu0 0
    %930 = vmatprep.subr.bf16.mxu0 0
    %931 = vmatpush1.bf16.msra.mxu0 0
    %932 = vmatprep.subr.bf16.mxu0 0
    %933 = vmatpush1.bf16.msra.mxu0 0
    %934 = vmatprep.subr.bf16.mxu0 0
    %935 = vmatpush1.bf16.msra.mxu0 0
    %936 = vmatprep.subr.bf16.mxu0 0
    %937 = vmatpush1.bf16.msra.mxu0 0
    %938 = vmatprep.subr.bf16.mxu0 0
    %939 = vmatpush1.bf16.msra.mxu0 %v917
    %940 = vmatprep.subr.bf16.mxu0 0
    %941 = vmatpush1.bf16.msra.mxu0 %v916
    %942 = vmatprep.subr.bf16.mxu0 0
    %943 = vmatpush2.bf16.msra.mxu0 0
    %944 = vmatprep.subr.bf16.mxu0 0
    %945 = vmatpush2.bf16.msra.mxu0 0
    %946 = vmatprep.subr.bf16.mxu0 0
    %947 = vmatpush2.bf16.msra.mxu0 0
    %948 = vmatprep.subr.bf16.mxu0 0
    %949 = vmatpush2.bf16.msra.mxu0 0
    %950 = vmatprep.subr.bf16.mxu0 0
    %951 = vmatpush2.bf16.msra.mxu0 0
    %952 = vmatprep.subr.bf16.mxu0 0
    %953 = vmatpush2.bf16.msra.mxu0 0
    %954 = vmatprep.subr.bf16.mxu0 0
    %955 = vmatpush2.bf16.msra.mxu0 0
    %956 = vmatprep.subr.bf16.mxu0 0
    %957 = vmatpush2.bf16.msra.mxu0 0
    %958 = vmatprep.mubr.bf16.mxu0 0
    %959 = vmatmul.mubr.bf16.gmra.mxu0 %v921
    %v960 = vpop.f32.mrf.mxu0
    %v961 = vadd.f32 0.0, %v960
    %v962 = vpop.f32.mrf.mxu0
    %v963 = vpop.f32.mrf.mxu0
    %v964 = vadd.f32 0.0, %v963
    %v965 = vpop.f32.mrf.mxu0
    %966 = vmatprep.mubr.bf16.mxu0 0
    %967 = vmatmul.mubr.bf16.gmra.mxu0 %v924
    %v968 = vpop.f32.mrf.mxu0
    %v969 = vadd.f32 0.0, %v968
    %v970 = vpop.f32.mrf.mxu0
    %v971 = vpop.f32.mrf.mxu0
    %v972 = vadd.f32 0.0, %v971
    %v973 = vpop.f32.mrf.mxu0
    %974 = vdwg.mxu0
    %v975 = vadd.f32 %v888, %v961
    %v976 = vadd.f32 %v891, %v964
    %v977 = vadd.f32 %v896, %v969
    %v978 = vadd.f32 %v899, %v972
    %v979 = vld [vmem:[%s1 + $0xe8] sm:$0x1]
    %v980 = vunpack.c.l.bf16 %v979
    %v981 = vlaneseq
    %v982 = vshrl.u32 %v981, 7
    %v983 = vsub.s32 0, %v982
    %v984 = vrot.slane %v980, %v983
    %v985 = vadd.f32 %v975, %v984
    %v986 = vadd.f32 %v976, %v984
    %v987 = vadd.f32 %v977, %v984
    %v988 = vadd.f32 %v978, %v984
    %v989 = vmax.f32 %v985, 0.0
    %v990 = vmax.f32 %v986, 0.0
    %v991 = vmax.f32 %v987, 0.0
    %v992 = vmax.f32 %v988, 0.0
    %v993 = vld [vmem:[%s1 + $0x78] sm:$0xf]
    %v994 = vld [vmem:[%s1 + $0x7c] sm:$0xf]
    %v995 = vld [vmem:[%s1 + $0x80] sm:$0xf]
    %v996 = vld [vmem:[%s1 + $0x84] sm:$0xf]
    %v997 = vrot.slane %v989, 4
    %v998 = vrot.slane %v990, 4
    %v999 = vrot.slane %v991, 4
    %v1000 = vrot.slane %v992, 4
    %v1001 = vsel %vm727, %v999, %v1000
    %v1002 = vsel %vm727, %v998, %v999
    %v1003 = vsel %vm727, %v997, %v998
    %v1004 = vsel %vm727, %v1000, %v997
    %v1005 = vsel %vm740, %v1004, 0.0
    %v1006 = vsel %vm741, %v1003, 0.0
    %v1007 = vsel %vm742, %v1002, 0.0
    %v1008 = vsel %vm743, %v1001, 0.0
    %v1009 = vpack.c.bf16 %v1006, %v1005
    %v1010 = vpack.c.bf16 %v1008, %v1007
    %v1011 = vld [vmem:[%s1 + $0x88] sm:$0xf]
    %v1012 = vld [vmem:[%s1 + $0x8c] sm:$0xf]
    %v1013 = vld [vmem:[%s1 + $0x90] sm:$0xf]
    %v1014 = vld [vmem:[%s1 + $0x94] sm:$0xf]
    %v1015 = vrot.slane %v989, 6
    %v1016 = vrot.slane %v990, 6
    %v1017 = vrot.slane %v991, 6
    %v1018 = vrot.slane %v992, 6
    %v1019 = vsel %vm142, %v1017, %v1018
    %v1020 = vsel %vm142, %v1016, %v1017
    %v1021 = vsel %vm142, %v1015, %v1016
    %v1022 = vsel %vm142, %v1018, %v1015
    %v1023 = vsel %vm155, %v1022, 0.0
    %v1024 = vsel %vm156, %v1021, 0.0
    %v1025 = vsel %vm157, %v1020, 0.0
    %v1026 = vsel %vm158, %v1019, 0.0
    %v1027 = vpack.c.bf16 %v1024, %v1023
    %v1028 = vpack.c.bf16 %v1026, %v1025
    %v1033 = vunpack.c.l.b16 %v1011
    %v1034 = vunpack.c.l.b16 %v1012
    %v1035 = vunpack.c.l.b16 %v1013
    %v1036 = vunpack.c.l.b16 %v1014
    %v1037 = vpack.c.b16 %v1034, %v1033
    %v1038 = vpack.c.b16 %v1036, %v1035
    %v1042 = vsel %vm438, %v1027, 0
    %v1045 = vsel %vm438, %v1028, 0
    %1047 = vmatprep.subr.bf16.mxu0 0
    %1048 = vmatpush1.bf16.msra.mxu0 0
    %1049 = vmatprep.subr.bf16.mxu0 0
    %1050 = vmatpush1.bf16.msra.mxu0 0
    %1051 = vmatprep.subr.bf16.mxu0 0
    %1052 = vmatpush1.bf16.msra.mxu0 0
    %1053 = vmatprep.subr.bf16.mxu0 0
    %1054 = vmatpush1.bf16.msra.mxu0 0
    %1055 = vmatprep.subr.bf16.mxu0 0
    %1056 = vmatpush1.bf16.msra.mxu0 0
    %1057 = vmatprep.subr.bf16.mxu0 0
    %1058 = vmatpush1.bf16.msra.mxu0 0
    %1059 = vmatprep.subr.bf16.mxu0 0
    %1060 = vmatpush1.bf16.msra.mxu0 %v1038
    %1061 = vmatprep.subr.bf16.mxu0 0
    %1062 = vmatpush1.bf16.msra.mxu0 %v1037
    %1063 = vmatprep.subr.bf16.mxu0 0
    %1064 = vmatpush2.bf16.msra.mxu0 0
    %1065 = vmatprep.subr.bf16.mxu0 0
    %1066 = vmatpush2.bf16.msra.mxu0 0
    %1067 = vmatprep.subr.bf16.mxu0 0
    %1068 = vmatpush2.bf16.msra.mxu0 0
    %1069 = vmatprep.subr.bf16.mxu0 0
    %1070 = vmatpush2.bf16.msra.mxu0 0
    %1071 = vmatprep.subr.bf16.mxu0 0
    %1072 = vmatpush2.bf16.msra.mxu0 0
    %1073 = vmatprep.subr.bf16.mxu0 0
    %1074 = vmatpush2.bf16.msra.mxu0 0
    %1075 = vmatprep.subr.bf16.mxu0 0
    %1076 = vmatpush2.bf16.msra.mxu0 0
    %1077 = vmatprep.subr.bf16.mxu0 0
    %1078 = vmatpush2.bf16.msra.mxu0 0
    %1079 = vmatprep.mubr.bf16.mxu0 0
    %1080 = vmatmul.mubr.bf16.gmra.mxu0 %v1042
    %v1081 = vpop.f32.mrf.mxu0
    %v1082 = vadd.f32 0.0, %v1081
    %v1083 = vpop.f32.mrf.mxu0
    %v1084 = vpop.f32.mrf.mxu0
    %v1085 = vadd.f32 0.0, %v1084
    %v1086 = vpop.f32.mrf.mxu0
    %1087 = vmatprep.mubr.bf16.mxu0 0
    %1088 = vmatmul.mubr.bf16.gmra.mxu0 %v1045
    %v1089 = vpop.f32.mrf.mxu0
    %v1090 = vadd.f32 0.0, %v1089
    %v1091 = vpop.f32.mrf.mxu0
    %v1092 = vpop.f32.mrf.mxu0
    %v1093 = vadd.f32 0.0, %v1092
    %v1094 = vpop.f32.mrf.mxu0
    %1095 = vdwg.mxu0
    %v1100 = vunpack.c.l.b16 %v993
    %v1101 = vunpack.c.l.b16 %v994
    %v1102 = vunpack.c.l.b16 %v995
    %v1103 = vunpack.c.l.b16 %v996
    %v1104 = vpack.c.b16 %v1101, %v1100
    %v1105 = vpack.c.b16 %v1103, %v1102
    %v1109 = vsel %vm438, %v1009, 0
    %v1112 = vsel %vm438, %v1010, 0
    %1114 = vmatprep.subr.bf16.mxu0 0
    %1115 = vmatpush1.bf16.msra.mxu0 0
    %1116 = vmatprep.subr.bf16.mxu0 0
    %1117 = vmatpush1.bf16.msra.mxu0 0
    %1118 = vmatprep.subr.bf16.mxu0 0
    %1119 = vmatpush1.bf16.msra.mxu0 0
    %1120 = vmatprep.subr.bf16.mxu0 0
    %1121 = vmatpush1.bf16.msra.mxu0 0
    %1122 = vmatprep.subr.bf16.mxu0 0
    %1123 = vmatpush1.bf16.msra.mxu0 0
    %1124 = vmatprep.subr.bf16.mxu0 0
    %1125 = vmatpush1.bf16.msra.mxu0 0
    %1126 = vmatprep.subr.bf16.mxu0 0
    %1127 = vmatpush1.bf16.msra.mxu0 %v1105
    %1128 = vmatprep.subr.bf16.mxu0 0
    %1129 = vmatpush1.bf16.msra.mxu0 %v1104
    %1130 = vmatprep.subr.bf16.mxu0 0
    %1131 = vmatpush2.bf16.msra.mxu0 0
    %1132 = vmatprep.subr.bf16.mxu0 0
    %1133 = vmatpush2.bf16.msra.mxu0 0
    %1134 = vmatprep.subr.bf16.mxu0 0
    %1135 = vmatpush2.bf16.msra.mxu0 0
    %1136 = vmatprep.subr.bf16.mxu0 0
    %1137 = vmatpush2.bf16.msra.mxu0 0
    %1138 = vmatprep.subr.bf16.mxu0 0
    %1139 = vmatpush2.bf16.msra.mxu0 0
    %1140 = vmatprep.subr.bf16.mxu0 0
    %1141 = vmatpush2.bf16.msra.mxu0 0
    %1142 = vmatprep.subr.bf16.mxu0 0
    %1143 = vmatpush2.bf16.msra.mxu0 0
    %1144 = vmatprep.subr.bf16.mxu0 0
    %1145 = vmatpush2.bf16.msra.mxu0 0
    %1146 = vmatprep.mubr.bf16.mxu0 0
    %1147 = vmatmul.mubr.bf16.gmra.mxu0 %v1109
    %v1148 = vpop.f32.mrf.mxu0
    %v1149 = vadd.f32 %v1082, %v1148
    %v1150 = vpop.f32.mrf.mxu0
    %v1151 = vpop.f32.mrf.mxu0
    %v1152 = vadd.f32 %v1085, %v1151
    %v1153 = vpop.f32.mrf.mxu0
    %1154 = vmatprep.mubr.bf16.mxu0 0
    %1155 = vmatmul.mubr.bf16.gmra.mxu0 %v1112
    %v1156 = vpop.f32.mrf.mxu0
    %v1157 = vadd.f32 %v1090, %v1156
    %v1158 = vpop.f32.mrf.mxu0
    %v1159 = vpop.f32.mrf.mxu0
    %v1160 = vadd.f32 %v1093, %v1159
    %v1161 = vpop.f32.mrf.mxu0
    %1162 = vdwg.mxu0
    %v1163 = vld [vmem:[%s1 + $0x98] sm:$0xf]
    %v1164 = vld [vmem:[%s1 + $0x9c] sm:$0xf]
    %v1165 = vld [vmem:[%s1 + $0xa0] sm:$0xf]
    %v1166 = vld [vmem:[%s1 + $0xa4] sm:$0xf]
    %v1167 = vpack.c.bf16 %v990, %v989
    %v1168 = vpack.c.bf16 %v992, %v991
    %v1173 = vunpack.c.l.b16 %v1163
    %v1174 = vunpack.c.l.b16 %v1164
    %v1175 = vunpack.c.l.b16 %v1165
    %v1176 = vunpack.c.l.b16 %v1166
    %v1177 = vpack.c.b16 %v1174, %v1173
    %v1178 = vpack.c.b16 %v1176, %v1175
    %v1182 = vsel %vm438, %v1167, 0
    %v1185 = vsel %vm438, %v1168, 0
    %1187 = vmatprep.subr.bf16.mxu0 0
    %1188 = vmatpush1.bf16.msra.mxu0 0
    %1189 = vmatprep.subr.bf16.mxu0 0
    %1190 = vmatpush1.bf16.msra.mxu0 0
    %1191 = vmatprep.subr.bf16.mxu0 0
    %1192 = vmatpush1.bf16.msra.mxu0 0
    %1193 = vmatprep.subr.bf16.mxu0 0
    %1194 = vmatpush1.bf16.msra.mxu0 0
    %1195 = vmatprep.subr.bf16.mxu0 0
    %1196 = vmatpush1.bf16.msra.mxu0 0
    %1197 = vmatprep.subr.bf16.mxu0 0
    %1198 = vmatpush1.bf16.msra.mxu0 0
    %1199 = vmatprep.subr.bf16.mxu0 0
    %1200 = vmatpush1.bf16.msra.mxu0 %v1178
    %1201 = vmatprep.subr.bf16.mxu0 0
    %1202 = vmatpush1.bf16.msra.mxu0 %v1177
    %1203 = vmatprep.subr.bf16.mxu0 0
    %1204 = vmatpush2.bf16.msra.mxu0 0
    %1205 = vmatprep.subr.bf16.mxu0 0
    %1206 = vmatpush2.bf16.msra.mxu0 0
    %1207 = vmatprep.subr.bf16.mxu0 0
    %1208 = vmatpush2.bf16.msra.mxu0 0
    %1209 = vmatprep.subr.bf16.mxu0 0
    %1210 = vmatpush2.bf16.msra.mxu0 0
    %1211 = vmatprep.subr.bf16.mxu0 0
    %1212 = vmatpush2.bf16.msra.mxu0 0
    %1213 = vmatprep.subr.bf16.mxu0 0
    %1214 = vmatpush2.bf16.msra.mxu0 0
    %1215 = vmatprep.subr.bf16.mxu0 0
    %1216 = vmatpush2.bf16.msra.mxu0 0
    %1217 = vmatprep.subr.bf16.mxu0 0
    %1218 = vmatpush2.bf16.msra.mxu0 0
    %1219 = vmatprep.mubr.bf16.mxu0 0
    %1220 = vmatmul.mubr.bf16.gmra.mxu0 %v1182
    %v1221 = vpop.f32.mrf.mxu0
    %v1222 = vadd.f32 0.0, %v1221
    %v1223 = vpop.f32.mrf.mxu0
    %v1224 = vpop.f32.mrf.mxu0
    %v1225 = vadd.f32 0.0, %v1224
    %v1226 = vpop.f32.mrf.mxu0
    %1227 = vmatprep.mubr.bf16.mxu0 0
    %1228 = vmatmul.mubr.bf16.gmra.mxu0 %v1185
    %v1229 = vpop.f32.mrf.mxu0
    %v1230 = vadd.f32 0.0, %v1229
    %v1231 = vpop.f32.mrf.mxu0
    %v1232 = vpop.f32.mrf.mxu0
    %v1233 = vadd.f32 0.0, %v1232
    %v1234 = vpop.f32.mrf.mxu0
    %1235 = vdwg.mxu0
    %v1236 = vadd.f32 %v1149, %v1222
    %v1237 = vadd.f32 %v1152, %v1225
    %v1238 = vadd.f32 %v1157, %v1230
    %v1239 = vadd.f32 %v1160, %v1233
    %v1240 = vld [vmem:[%s1 + $0xf0] sm:$0x1]
    %v1241 = vunpack.c.l.bf16 %v1240
    %v1242 = vlaneseq
    %v1243 = vshrl.u32 %v1242, 7
    %v1244 = vsub.s32 0, %v1243
    %v1245 = vrot.slane %v1241, %v1244
    %v1246 = vadd.f32 %v1236, %v1245
    %v1247 = vadd.f32 %v1237, %v1245
    %v1248 = vadd.f32 %v1238, %v1245
    %v1249 = vadd.f32 %v1239, %v1245
    %v1250 = vmax.f32 %v1246, 0.0
    %v1251 = vmax.f32 %v1247, 0.0
    %v1252 = vmax.f32 %v1248, 0.0
    %v1253 = vmax.f32 %v1249, 0.0
    %v1254 = vadd.f32 %v1250, %v715
    %v1255 = vadd.f32 %v1251, %v716
    %v1256 = vadd.f32 %v1252, %v717
    %v1257 = vadd.f32 %v1253, %v718
    %v1258 = vmax.f32 %v1254, 0.0
    %v1259 = vmax.f32 %v1255, 0.0
    %v1260 = vmax.f32 %v1256, 0.0
    %v1261 = vmax.f32 %v1257, 0.0
    %v1262 = vsel %vm438, %v1258, 0.0
    %v1263 = vsel %vm438, %v1259, 0.0
    %v1264 = vadd.f32 %v1262, %v1263
    %v1265 = vrot.slane %v1264, 4
    %v1266 = vadd.f32 %v1264, %v1265
    %v1267 = vrot.slane %v1266, 2
    %v1268 = vadd.f32 %v1266, %v1267
    %v1269 = vrot.slane %v1268, 1
    %v1270 = vadd.f32 %v1268, %v1269
    %v1271 = vsel %vm438, %v1260, 0.0
    %v1272 = vsel %vm438, %v1261, 0.0
    %v1273 = vadd.f32 %v1271, %v1272
    %v1274 = vrot.slane %v1273, 4
    %v1275 = vadd.f32 %v1273, %v1274
    %v1276 = vrot.slane %v1275, 2
    %v1277 = vadd.f32 %v1275, %v1276
    %v1278 = vrot.slane %v1277, 1
    %v1279 = vadd.f32 %v1277, %v1278
    %v1280 = vrcp.pop 16.0
    %v1281 = vmul.f32 %v1270, %v1280
    %v1282 = vmul.f32 %v1279, %v1280
    %v1283 = vld [vmem:[%s1 + $0xb0] sm:$0xf]
    %v1284 = vld [vmem:[%s1 + $0xb4] sm:$0xf]
    %v1285 = vld [vmem:[%s1 + $0xb8] sm:$0xf]
    %v1286 = vld [vmem:[%s1 + $0xbc] sm:$0xf]
    %v1287 = vpack.c.bf16 %v1281, %v1281
    %v1288 = vpack.c.bf16 %v1282, %v1282
    %v1291 = vunpack.c.l.b16 %v1287
    %v1292 = vunpack.c.l.b16 %v1288
    %v1293 = vsel %vm84, %v1292, %v1291
    %v1294 = vpack.c.b16 %v1293, %v1293
    %v1299 = vunpack.c.l.b16 %v1283
    %v1300 = vunpack.c.l.b16 %v1284
    %v1301 = vunpack.c.l.b16 %v1285
    %v1302 = vunpack.c.l.b16 %v1286
    %v1303 = vpack.c.b16 %v1300, %v1299
    %v1304 = vpack.c.b16 %v1302, %v1301
    %v1308 = vsel %vm438, %v1294, 0
    %1310 = vmatprep.subr.bf16.mxu0 0
    %1311 = vmatpush1.bf16.msra.mxu0 0
    %1312 = vmatprep.subr.bf16.mxu0 0
    %1313 = vmatpush1.bf16.msra.mxu0 0
    %1314 = vmatprep.subr.bf16.mxu0 0
    %1315 = vmatpush1.bf16.msra.mxu0 0
    %1316 = vmatprep.subr.bf16.mxu0 0
    %1317 = vmatpush1.bf16.msra.mxu0 0
    %1318 = vmatprep.subr.bf16.mxu0 0
    %1319 = vmatpush1.bf16.msra.mxu0 0
    %1320 = vmatprep.subr.bf16.mxu0 0
    %1321 = vmatpush1.bf16.msra.mxu0 0
    %1322 = vmatprep.subr.bf16.mxu0 0
    %1323 = vmatpush1.bf16.msra.mxu0 %v1304
    %1324 = vmatprep.subr.bf16.mxu0 0
    %1325 = vmatpush1.bf16.msra.mxu0 %v1303
    %1326 = vmatprep.subr.bf16.mxu0 0
    %1327 = vmatpush2.bf16.msra.mxu0 0
    %1328 = vmatprep.subr.bf16.mxu0 0
    %1329 = vmatpush2.bf16.msra.mxu0 0
    %1330 = vmatprep.subr.bf16.mxu0 0
    %1331 = vmatpush2.bf16.msra.mxu0 0
    %1332 = vmatprep.subr.bf16.mxu0 0
    %1333 = vmatpush2.bf16.msra.mxu0 0
    %1334 = vmatprep.subr.bf16.mxu0 0
    %1335 = vmatpush2.bf16.msra.mxu0 0
    %1336 = vmatprep.subr.bf16.mxu0 0
    %1337 = vmatpush2.bf16.msra.mxu0 0
    %1338 = vmatprep.subr.bf16.mxu0 0
    %1339 = vmatpush2.bf16.msra.mxu0 0
    %1340 = vmatprep.subr.bf16.mxu0 0
    %1341 = vmatpush2.bf16.msra.mxu0 0
    %1342 = vmatprep.mubr.bf16.mxu0 0
    %1343 = vmatmul.mubr.bf16.gmra.mxu0 %v1308
    %v1344 = vpop.f32.mrf.mxu0
    %v1345 = vadd.f32 %v132, %v1344
    %v1346 = vpop.f32.mrf.mxu0
    %v1347 = vpop.f32.mrf.mxu0
    %v1348 = vpop.f32.mrf.mxu0
    %1349 = vdwg.mxu0
    %vm1350 = vcmp.ge.f32.partialorder %v1345, 0.0
    %v1351 = vmul.f32 %v1345, 0.01
    %v1352 = vsel %vm1350, %v1345, %v1351
    %v1353 = vld [vmem:[%s1 + $0xc8] sm:$0xf]
    %v1354 = vld [vmem:[%s1 + $0xcc] sm:$0xf]
    %v1355 = vld [vmem:[%s1 + $0xd0] sm:$0xf]
    %v1356 = vld [vmem:[%s1 + $0xd4] sm:$0xf]
    %v1357 = vpack.c.bf16 %v1352, %v1352
    %v1358 = vld [vmem:[%s1 + $0x108] sm:$0x1]
    %v1359 = vunpack.c.l.bf16 %v1358
    %v1360 = vlaneseq
    %v1361 = vshrl.u32 %v1360, 7
    %v1362 = vsub.s32 0, %v1361
    %v1363 = vrot.slane %v1359, %v1362
    %v1368 = vunpack.c.l.b16 %v1353
    %v1369 = vunpack.c.l.b16 %v1354
    %v1370 = vunpack.c.l.b16 %v1355
    %v1371 = vunpack.c.l.b16 %v1356
    %v1372 = vpack.c.b16 %v1369, %v1368
    %v1373 = vpack.c.b16 %v1371, %v1370
    %v1377 = vsel %vm438, %v1357, 0
    %1379 = vmatprep.subr.bf16.mxu0 0
    %1380 = vmatpush1.bf16.msra.mxu0 0
    %1381 = vmatprep.subr.bf16.mxu0 0
    %1382 = vmatpush1.bf16.msra.mxu0 0
    %1383 = vmatprep.subr.bf16.mxu0 0
    %1384 = vmatpush1.bf16.msra.mxu0 0
    %1385 = vmatprep.subr.bf16.mxu0 0
    %1386 = vmatpush1.bf16.msra.mxu0 0
    %1387 = vmatprep.subr.bf16.mxu0 0
    %1388 = vmatpush1.bf16.msra.mxu0 0
    %1389 = vmatprep.subr.bf16.mxu0 0
    %1390 = vmatpush1.bf16.msra.mxu0 0
    %1391 = vmatprep.subr.bf16.mxu0 0
    %1392 = vmatpush1.bf16.msra.mxu0 %v1373
    %1393 = vmatprep.subr.bf16.mxu0 0
    %1394 = vmatpush1.bf16.msra.mxu0 %v1372
    %1395 = vmatprep.subr.bf16.mxu0 0
    %1396 = vmatpush2.bf16.msra.mxu0 0
    %1397 = vmatprep.subr.bf16.mxu0 0
    %1398 = vmatpush2.bf16.msra.mxu0 0
    %1399 = vmatprep.subr.bf16.mxu0 0
    %1400 = vmatpush2.bf16.msra.mxu0 0
    %1401 = vmatprep.subr.bf16.mxu0 0
    %1402 = vmatpush2.bf16.msra.mxu0 0
    %1403 = vmatprep.subr.bf16.mxu0 0
    %1404 = vmatpush2.bf16.msra.mxu0 0
    %1405 = vmatprep.subr.bf16.mxu0 0
    %1406 = vmatpush2.bf16.msra.mxu0 0
    %1407 = vmatprep.subr.bf16.mxu0 0
    %1408 = vmatpush2.bf16.msra.mxu0 0
    %1409 = vmatprep.subr.bf16.mxu0 0
    %1410 = vmatpush2.bf16.msra.mxu0 0
    %1411 = vmatprep.mubr.bf16.mxu0 0
    %1412 = vmatmul.mubr.bf16.gmra.mxu0 %v1377
    %v1413 = vpop.f32.mrf.mxu0
    %v1414 = vadd.f32 %v1363, %v1413
    %v1415 = vpop.f32.mrf.mxu0
    %v1416 = vpop.f32.mrf.mxu0
    %v1417 = vpop.f32.mrf.mxu0
    %1418 = vdwg.mxu0
    %vm1419 = vcmask 254976
    %1420 = vst.msk [vmem:[#allocation2] sm:$0x3] %vm1419, %v1414
    // Predicated region
    $region10: #{spatial_regression_tcn_forward.1} parent=1 // pred_check
      _
    $region11: #{spatial_regression_tcn_forward.1} parent=1 // pred_check_branch
      %1422 = sbr.rel (0) target = $region13
    $region12: #{spatial_regression_tcn_forward.1} parent=1 // pred_region
      %s1424 = ssub.s32 32, 32
      %1425 = vsyncadd [#allocation3], %s1424
      %s1427 = sshll.u32 [#allocation2], 4
      %s1428 = int_to_ptr.vmem [resolvable:$true] %s1427
      %1430 = dma.vmem_to_hbm [thread:$0]  %s1428, 32, %s2, [#allocation3]
    $region13: #{spatial_regression_tcn_forward.1} parent=1 // pred_fallthru
      _
    // Predicated region
    $region14: #{spatial_regression_tcn_forward.1} parent=1 // pred_check
      _
    $region15: #{spatial_regression_tcn_forward.1} parent=1 // pred_check_branch
      %1432 = sbr.rel (0) target = $region17
    $region16: #{spatial_regression_tcn_forward.1} parent=1 // pred_region
      %1433 = dma.done [#allocation3], 32
    $region17: #{spatial_regression_tcn_forward.1} parent=1 // pred_fallthru
      _
    %1434 = vsyncpa [#allocation3], 1

</llo_original>
